<compile_context>
chip_gen: v5e
topology: v5e:2x2
jax: 0.10.0
libtpu: 0.0.40
codegen_flags: <defaults>
</compile_context>

<pallas_src>
import functools

import jax
import jax.numpy as jnp
import numpy as np
from jax import lax
from jax.experimental import pallas as pl
from jax.experimental.pallas import tpu as pltpu


# ---------------------------------------------------------------------------
# Static parity bookkeeping: output parity p with 3x3 tap d reads upsampled
# coordinate 2*i + (p + d - 1) = 2*(i + r) + q  (parity plane q, row shift r).
# ---------------------------------------------------------------------------
def _parity_users():
    users = {}
    for p in (0, 1):
        for d in (0, 1, 2):
            s = p + d - 1
            users.setdefault((s % 2, s // 2), []).append((p, d))
    return list(users.keys()), users


# ---------------------------------------------------------------------------
# fused Pallas kernel (one (batch, row-band) tile per grid step)
# ---------------------------------------------------------------------------
def _make_decoder_kernel(TH, W, Cin1, Cout, Cx, lead, rtot, cdt):
    Cmid = Cout + Cx
    Wp = W + 2                      # padded row width (1-col halo each side)
    Np = (TH + 2) * Wp              # flat rows written per parity plane
    M = TH * Wp                     # flat output rows (incl. 2 junk cols/row)
    pkeys, _ = _parity_users()

    def kernel(x1_ref, x2_ref, wt_ref, wcomb_ref, bc_ref, o_ref, pp_ref):
        f32 = jnp.float32

        # Lead/tail pad rows only ever feed the junk output columns, but keep
        # the scratch fully defined (two small contiguous stores).
        pp_ref[:, 0:lead, :] = jnp.zeros((4, lead, Cmid), cdt)
        pp_ref[:, lead + Np:rtot, :] = jnp.zeros((4, rtot - lead - Np, Cmid), cdt)

        # ConvTranspose2d(k=2,s=2) + bias for all 4 taps: ONE MXU matmul.
        # x1 arrives flat / zero-padded with a trailing ones-channel, so the
        # bias row of wt_ref applies exactly where the upsampled image exists.
        u = jnp.dot(x1_ref[0, 0], wt_ref[...],
                    preferred_element_type=f32)               # (Np, 4*Cout)
        ub = u.astype(cdt)
        for g in range(4):                                    # plane g = ki*2+kj
            pp_ref[g, lead:lead + Np, 0:Cout] = ub[:, g * Cout:(g + 1) * Cout]

        # concat((up, x2), dim=C): x2 arrives parity-split, padded and flat ->
        # one wide contiguous store covering all 4 planes.
        pp_ref[:, lead:lead + Np, Cout:Cmid] = x2_ref[0, 0]

        # 3x3 conv (pad=1) + bias + ReLU: 16 contiguous flat-window matmuls
        # into one fp32 accumulator (pure `acc += dot` chain, no reshapes).
        acc = jnp.zeros((M, 4 * Cout), f32)
        n = 0
        for (qi, ri) in pkeys:
            for (qj, rj) in pkeys:
                q = qi * 2 + qj
                start = lead + (1 + ri) * Wp + rj             # static offset
                acc = acc + jnp.dot(pp_ref[q, start:start + M, :],
                                    wcomb_ref[n],
                                    preferred_element_type=f32)
                n += 1

        o_ref[0, 0] = jnp.maximum(acc + bc_ref[...], 0.0)

    return kernel


# ---------------------------------------------------------------------------
# VMEM sizing / row-band selection
# ---------------------------------------------------------------------------
def _vmem_bytes(TH, W, Cin1, Cout, Cx):
    Cmid = Cout + Cx
    Wp = W + 2
    Np = (TH + 2) * Wp
    M = TH * Wp
    rtot = -(-(8 + Np + 1) // 8) * 8
    x1_blk = Np * Cin1 * 2
    x2_blk = 4 * Np * Cx * 2
    o_blk = M * 4 * Cout * 4
    wts = (Cin1 * 4 * Cout + 16 * Cmid * 4 * Cout) * 2 + 4 * Cout * 4
    scratch = 4 * rtot * Cmid * 2
    acc = M * 4 * Cout * 4
    # inputs/outputs (and conservatively the weights) are double-buffered
    return 2 * (x1_blk + x2_blk + o_blk + wts) + scratch + acc


def _vmem_budget_bytes():
    # v7x TensorCores only have 64 MiB of VMEM; v5e/v6e have 128 MiB.
    try:
        kind = jax.devices()[0].device_kind.lower()
    except Exception:  # pragma: no cover - device query is best-effort
        kind = ""
    if "v5" in kind or "v6" in kind:
        return 80 << 20
    return 40 << 20


def _choose_row_band(H, W, Cin1, Cout, Cx, budget):
    feasible = [t for t in range(1, H + 1)
                if _vmem_bytes(t, W, Cin1, Cout, Cx) <= budget]
    if not feasible:
        return 1
    best = max(feasible)
    divisors = [t for t in feasible if H % t == 0]
    if divisors and 2 * max(divisors) >= best:   # prefer no ragged/pad band
        return max(divisors)
    return best


# ---------------------------------------------------------------------------
# wrapper: PyTorch-style NCHW in / NCHW out
# ---------------------------------------------------------------------------
@functools.partial(jax.jit, static_argnames=("row_band",))
def decoder_forward(x1_nchw, x2_nchw, params, row_band=None):
    wt, bt, wc, bc = params["wt"], params["bt"], params["wc"], params["bc"]
    B, Cin, H, W = x1_nchw.shape
    Cout = bt.shape[0]
    Cx = x2_nchw.shape[1]
    Cmid = wc.shape[1]
    assert Cmid == Cout + Cx
    assert x2_nchw.shape == (B, Cx, 2 * H, 2 * W)

    cdt = jnp.bfloat16
    Cin1 = Cin + 1
    Wp = W + 2

    budget = _vmem_budget_bytes()
    TH = int(row_band) if row_band is not None else _choose_row_band(
        H, W, Cin1, Cout, Cx, budget)
    TH = max(1, min(TH, H))
    nH = -(-H // TH)
    Hp = nH * TH
    Np = (TH + 2) * Wp
    M = TH * Wp
    lead = 8
    rtot = -(-(lead + Np + 1) // 8) * 8

    # ---- layout glue (one fused XLA pass per tensor) ------------------------
    # x1: NCHW -> NHWC, append a "valid" ones channel (carries the transposed-
    # conv bias and keeps zero padding exact), pad by the 1-pixel halo, cut into
    # overlapping row bands and flatten each band row-major.
    x1_nhwc = jnp.transpose(x1_nchw, (0, 2, 3, 1))
    x1_aug = jnp.concatenate(
        [x1_nhwc, jnp.ones((B, H, W, 1), x1_nhwc.dtype)], axis=-1)
    x1_pad = jnp.pad(x1_aug, ((0, 0), (1, Hp - H + 1), (1, 1), (0, 0))).astype(cdt)
    row_idx = np.arange(nH)[:, None] * TH + np.arange(TH + 2)[None, :]
    x1_flat = x1_pad[:, row_idx].reshape(B, nH, Np, Cin1)

    # x2: split into its 4 spatial-parity planes, same pad / band / flatten.
    x2p = jnp.transpose(x2_nchw.reshape(B, Cx, H, 2, W, 2),
                        (0, 3, 5, 2, 4, 1)).reshape(B, 4, H, W, Cx)
    x2_pad = jnp.pad(x2p, ((0, 0), (0, 0), (1, Hp - H + 1), (1, 1), (0, 0))).astype(cdt)
    x2_flat = jnp.transpose(x2_pad[:, :, row_idx],
                            (0, 2, 1, 3, 4, 5)).reshape(B, nH, 4, Np, Cx)

    # ConvTranspose weight (Cin,Cout,2,2) -> (Cin,(ki,kj,oc)); bias -> extra row.
    wt_mat = jnp.transpose(wt, (0, 2, 3, 1)).reshape(Cin, 4 * Cout)
    wt_aug = jnp.concatenate(
        [wt_mat, jnp.tile(bt, 4).reshape(1, 4 * Cout)], axis=0).astype(cdt)

    # Conv weight (Cout,Cmid,3,3) -> 16 pre-summed zero-expanded (Cmid,4*Cout)
    # matrices, one per (row-parity/shift, col-parity/shift) flat window.
    wc_t = jnp.transpose(wc, (2, 3, 1, 0))                  # (3,3,Cmid,Cout)
    zeros_blk = jnp.zeros((Cmid, Cout), wc.dtype)
    pkeys, users = _parity_users()
    mats = []
    for (qi, ri) in pkeys:
        row_map = dict(users[(qi, ri)])
        for (qj, rj) in pkeys:
            col_map = dict(users[(qj, rj)])
            blocks = []
            for pi in (0, 1):
                for pj in (0, 1):
                    dh, dw = row_map.get(pi), col_map.get(pj)
                    blocks.append(zeros_blk if dh is None or dw is None
                                  else wc_t[dh, dw])
            mats.append(jnp.concatenate(blocks, axis=-1))   # (Cmid, 4*Cout)
    wcomb = jnp.stack(mats, axis=0).astype(cdt)             # (16, Cmid, 4*Cout)
    bc4_row = jnp.tile(bc, 4).reshape(1, 4 * Cout).astype(jnp.float32)

    kernel = _make_decoder_kernel(TH, W, Cin1, Cout, Cx, lead, rtot, cdt)

    vmem_limit = int(min(max(2 * _vmem_bytes(TH, W, Cin1, Cout, Cx) + (8 << 20),
                             32 << 20), 100 << 20))

    out = pl.pallas_call(
        kernel,
        out_shape=jax.ShapeDtypeStruct((B, nH, M, 4 * Cout), jnp.float32),
        grid_spec=pltpu.PrefetchScalarGridSpec(
            num_scalar_prefetch=0,
            grid=(B, nH),
            in_specs=[
                pl.BlockSpec((1, 1, Np, Cin1), lambda b, h: (b, h, 0, 0)),
                pl.BlockSpec((1, 1, 4, Np, Cx), lambda b, h: (b, h, 0, 0, 0)),
                pl.BlockSpec((Cin1, 4 * Cout), lambda b, h: (0, 0)),
                pl.BlockSpec((16, Cmid, 4 * Cout), lambda b, h: (0, 0, 0)),
                pl.BlockSpec((1, 4 * Cout), lambda b, h: (0, 0)),
            ],
            out_specs=pl.BlockSpec((1, 1, M, 4 * Cout), lambda b, h: (b, h, 0, 0)),
            scratch_shapes=[pltpu.VMEM((4, rtot, Cmid), cdt)],
        ),
        compiler_params=pltpu.CompilerParams(
            dimension_semantics=("parallel", "parallel"),
            vmem_limit_bytes=vmem_limit,
        ),
    )(x1_flat, x2_flat, wt_aug, wcomb, bc4_row)

    # [b, h, i, jj, pi, pj, oc] -> NCHW (B, Cout, 2H, 2W); drop the 2 junk
    # columns per row and any padded rows.  One fused output transpose.
    out = out.reshape(B, nH, TH, Wp, 2, 2, Cout)[:, :, :, 1:W + 1]
    out = jnp.transpose(out, (0, 6, 1, 2, 4, 3, 5)).reshape(B, Cout, 2 * Hp, 2 * W)
    return out[:, :, :2 * H, :]


# ---------------------------------------------------------------------------
# pure-JAX reference (PyTorch semantics, NCHW)
# ---------------------------------------------------------------------------
def decoder_reference(x1, x2, params, compute_dtype=None):
    """If compute_dtype is given, inputs/weights (and the upsampled activation)
    are quantized to it, mirroring the kernel's bf16 / fp32-accumulate path."""
    wt, bt, wc, bc = params["wt"], params["bt"], params["wc"], params["bc"]
    f32 = jnp.float32

    def q(a):
        return a.astype(compute_dtype).astype(f32) if compute_dtype else a

    x1q, x2q, wtq, wcq, btq = q(x1), q(x2), q(wt), q(wc), q(bt)
    B, Cin, H, W = x1.shape
    Cout = bt.shape[0]
    # ConvTranspose2d(k=2,s=2): out[b,o,2i+k,2j+l] = sum_c x[b,c,i,j]*W[c,o,k,l]
    t = jnp.einsum("bcij,cokl->boikjl", x1q, wtq, precision=lax.Precision.HIGHEST)
    up = q(t.reshape(B, Cout, 2 * H, 2 * W) + btq[None, :, None, None])
    cat = jnp.concatenate([up, x2q], axis=1)
    conv = lax.conv_general_dilated(
        cat, wcq, window_strides=(1, 1), padding=((1, 1), (1, 1)),
        dimension_numbers=("NCHW", "OIHW", "NCHW"),
        precision=lax.Precision.HIGHEST)
    return jnp.maximum(conv + bc[None, :, None, None], 0.0)


if __name__ == "__main__":
    key = jax.random.PRNGKey(0)
    # small shapes: in_channels=8, out_channels=4, middle_channels=8
    # (skip tensor x2 carries middle - out = 4 channels)
    B, Cin, Cout, Cmid = 2, 8, 4, 8
    H = W = 8
    Cx = Cmid - Cout

    k1, k2, k3, k4, k5, k6 = jax.random.split(key, 6)
    x1 = jax.random.normal(k1, (B, Cin, H, W), jnp.float32)              # NCHW
    x2 = jax.random.normal(k2, (B, Cx, 2 * H, 2 * W), jnp.float32)       # NCHW

    params = {
        "wt": 0.1 * jax.random.normal(k3, (Cin, Cout, 2, 2), jnp.float32),
        "bt": 0.1 * jax.random.normal(k4, (Cout,), jnp.float32),
        "wc": 0.1 * jax.random.normal(k5, (Cout, Cmid, 3, 3), jnp.float32),
        "bc": 0.1 * jax.random.normal(k6, (Cout,), jnp.float32),
    }

    # references: one matching the kernel's bf16 pipeline, one full fp32
    ref_q = jax.block_until_ready(decoder_reference(x1, x2, params, jnp.bfloat16))
    ref = jax.block_until_ready(decoder_reference(x1, x2, params))

    # run both the whole-image path and the banded path (inter-band halo +
    # ragged last band via padding) and check both against the references.
    for band in (None, 3):
        out = jax.block_until_ready(decoder_forward(x1, x2, params, row_band=band))
        assert out.shape == (B, Cout, 2 * H, 2 * W), (band, out.shape)

        err_q = float(np.max(np.abs(np.asarray(out) - np.asarray(ref_q))))
        assert np.allclose(np.asarray(out), np.asarray(ref_q),
                           atol=5e-3, rtol=5e-3), (band, err_q)

        err = float(np.max(np.abs(np.asarray(out) - np.asarray(ref))))
        assert np.allclose(np.asarray(out), np.asarray(ref),
                           atol=1e-1, rtol=1e-1), (band, err)

    print("KERNEL_OK")
</pallas_src>

<mosaic_0001>
module attributes {stable_mosaic.version = 11 : i64} {
  func.func @kernel(%arg0: i32, %arg1: i32, %arg2: memref<1x1x100x9xbf16, #tpu.memory_space<vmem>>, %arg3: memref<1x1x4x100x4xbf16, #tpu.memory_space<vmem>>, %arg4: memref<9x16xbf16, #tpu.memory_space<vmem>>, %arg5: memref<16x8x16xbf16, #tpu.memory_space<vmem>>, %arg6: memref<1x16xf32, #tpu.memory_space<vmem>>, %arg7: memref<1x1x80x16xf32, #tpu.memory_space<vmem>>, %arg8: memref<4x112x8xbf16, #tpu.memory_space<vmem>>) attributes {dimension_semantics = [#tpu.dimension_semantics<parallel>, #tpu.dimension_semantics<parallel>], iteration_bounds = array<i64: 2, 1>, scalar_prefetch = 0 : i64, scratch_operands = 1 : i64, tpu.core_type = #tpu.core_type<tc>, window_params = [{transform_indices = @transform_0, window_bounds = array<i64: 1, 1, 100, 9>}, {transform_indices = @transform_1, window_bounds = array<i64: 1, 1, 4, 100, 4>}, {pipeline_mode = #tpu.pipeline_mode<synchronous>, transform_indices = @transform_2, window_bounds = array<i64: 9, 16>}, {pipeline_mode = #tpu.pipeline_mode<synchronous>, transform_indices = @transform_3, window_bounds = array<i64: 16, 8, 16>}, {pipeline_mode = #tpu.pipeline_mode<synchronous>, transform_indices = @transform_4, window_bounds = array<i64: 1, 16>}, {transform_indices = @transform_5, window_bounds = array<i64: 1, 1, 80, 16>}]} {
    %cst = arith.constant 0.000000e+00 : bf16
    %0 = vector.broadcast %cst : bf16 to vector<4x8x8xbf16>
    %c0 = arith.constant 0 : index
    %c0_0 = arith.constant 0 : index
    %c0_1 = arith.constant 0 : index
    %1 = vector.load %arg8[%c0, %c0_0, %c0_1] : memref<4x112x8xbf16, #tpu.memory_space<vmem>>, vector<4x8x8xbf16>
    tpu.vector_store %arg8[%c0, %c0_0, %c0_1], %0 {strides = array<i32>} : memref<4x112x8xbf16, #tpu.memory_space<vmem>>, vector<4x8x8xbf16>,
    %cst_2 = arith.constant 0.000000e+00 : bf16
    %2 = vector.broadcast %cst_2 : bf16 to vector<4x4x8xbf16>
    %c0_3 = arith.constant 0 : index
    %c108 = arith.constant 108 : index
    %c0_4 = arith.constant 0 : index
    %3 = vector.load %arg8[%c0_3, %c108, %c0_4] : memref<4x112x8xbf16, #tpu.memory_space<vmem>>, vector<4x4x8xbf16>
    tpu.vector_store %arg8[%c0_3, %c108, %c0_4], %2 {strides = array<i32>} : memref<4x112x8xbf16, #tpu.memory_space<vmem>>, vector<4x4x8xbf16>,
    %c0_5 = arith.constant 0 : index
    %c0_6 = arith.constant 0 : index
    %c0_7 = arith.constant 0 : index
    %c0_8 = arith.constant 0 : index
    %4 = vector.load %arg2[%c0_5, %c0_6, %c0_7, %c0_8] : memref<1x1x100x9xbf16, #tpu.memory_space<vmem>>, vector<1x1x100x9xbf16>
    %5 = vector.shape_cast %4 : vector<1x1x100x9xbf16> to vector<100x9xbf16>
    %c0_9 = arith.constant 0 : index
    %c0_10 = arith.constant 0 : index
    %6 = vector.load %arg4[%c0_9, %c0_10] : memref<9x16xbf16, #tpu.memory_space<vmem>>, vector<9x16xbf16>
    %cst_11 = arith.constant dense<0.000000e+00> : vector<100x16xf32>
    %7 = tpu.matmul %5, %6, %cst_11 {dimension_numbers = #tpu.dot_dimension_numbers<[1], [0], [0], [1], [0, 0, 1, 1], [], []>} : vector<100x9xbf16>, vector<9x16xbf16>, vector<100x16xf32> -> vector<100x16xf32>
    %8 = arith.truncf %7 : vector<100x16xf32> to vector<100x16xbf16>
    %9 = vector.extract_strided_slice %8 {offsets = [0, 0], sizes = [100, 4], strides = [1, 1]} : vector<100x16xbf16> to vector<100x4xbf16>
    %c0_12 = arith.constant 0 : index
    %c8 = arith.constant 8 : index
    %c0_13 = arith.constant 0 : index
    %10 = vector.load %arg8[%c0_12, %c8, %c0_13] : memref<4x112x8xbf16, #tpu.memory_space<vmem>>, vector<1x100x4xbf16>
    %11 = vector.shape_cast %10 : vector<1x100x4xbf16> to vector<100x4xbf16>
    %12 = vector.shape_cast %9 : vector<100x4xbf16> to vector<1x100x4xbf16>
    tpu.vector_store %arg8[%c0_12, %c8, %c0_13], %12 {strides = array<i32>} : memref<4x112x8xbf16, #tpu.memory_space<vmem>>, vector<1x100x4xbf16>,
    %13 = vector.extract_strided_slice %8 {offsets = [0, 4], sizes = [100, 4], strides = [1, 1]} : vector<100x16xbf16> to vector<100x4xbf16>
    %c1 = arith.constant 1 : index
    %c8_14 = arith.constant 8 : index
    %c0_15 = arith.constant 0 : index
    %14 = vector.load %arg8[%c1, %c8_14, %c0_15] : memref<4x112x8xbf16, #tpu.memory_space<vmem>>, vector<1x100x4xbf16>
    %15 = vector.shape_cast %14 : vector<1x100x4xbf16> to vector<100x4xbf16>
    %16 = vector.shape_cast %13 : vector<100x4xbf16> to vector<1x100x4xbf16>
    tpu.vector_store %arg8[%c1, %c8_14, %c0_15], %16 {strides = array<i32>} : memref<4x112x8xbf16, #tpu.memory_space<vmem>>, vector<1x100x4xbf16>,
    %17 = vector.extract_strided_slice %8 {offsets = [0, 8], sizes = [100, 4], strides = [1, 1]} : vector<100x16xbf16> to vector<100x4xbf16>
    %c2 = arith.constant 2 : index
    %c8_16 = arith.constant 8 : index
    %c0_17 = arith.constant 0 : index
    %18 = vector.load %arg8[%c2, %c8_16, %c0_17] : memref<4x112x8xbf16, #tpu.memory_space<vmem>>, vector<1x100x4xbf16>
    %19 = vector.shape_cast %18 : vector<1x100x4xbf16> to vector<100x4xbf16>
    %20 = vector.shape_cast %17 : vector<100x4xbf16> to vector<1x100x4xbf16>
    tpu.vector_store %arg8[%c2, %c8_16, %c0_17], %20 {strides = array<i32>} : memref<4x112x8xbf16, #tpu.memory_space<vmem>>, vector<1x100x4xbf16>,
    %21 = vector.extract_strided_slice %8 {offsets = [0, 12], sizes = [100, 4], strides = [1, 1]} : vector<100x16xbf16> to vector<100x4xbf16>
    %c3 = arith.constant 3 : index
    %c8_18 = arith.constant 8 : index
    %c0_19 = arith.constant 0 : index
    %22 = vector.load %arg8[%c3, %c8_18, %c0_19] : memref<4x112x8xbf16, #tpu.memory_space<vmem>>, vector<1x100x4xbf16>
    %23 = vector.shape_cast %22 : vector<1x100x4xbf16> to vector<100x4xbf16>
    %24 = vector.shape_cast %21 : vector<100x4xbf16> to vector<1x100x4xbf16>
    tpu.vector_store %arg8[%c3, %c8_18, %c0_19], %24 {strides = array<i32>} : memref<4x112x8xbf16, #tpu.memory_space<vmem>>, vector<1x100x4xbf16>,
    %c0_20 = arith.constant 0 : index
    %c0_21 = arith.constant 0 : index
    %c0_22 = arith.constant 0 : index
    %c0_23 = arith.constant 0 : index
    %c0_24 = arith.constant 0 : index
    %25 = vector.load %arg3[%c0_20, %c0_21, %c0_22, %c0_23, %c0_24] : memref<1x1x4x100x4xbf16, #tpu.memory_space<vmem>>, vector<1x1x4x100x4xbf16>
    %26 = vector.shape_cast %25 : vector<1x1x4x100x4xbf16> to vector<4x100x4xbf16>
    %c0_25 = arith.constant 0 : index
    %c8_26 = arith.constant 8 : index
    %c4 = arith.constant 4 : index
    %27 = vector.load %arg8[%c0_25, %c8_26, %c4] : memref<4x112x8xbf16, #tpu.memory_space<vmem>>, vector<4x100x4xbf16>
    tpu.vector_store %arg8[%c0_25, %c8_26, %c4], %26 {strides = array<i32>} : memref<4x112x8xbf16, #tpu.memory_space<vmem>>, vector<4x100x4xbf16>,
    %cst_27 = arith.constant 0.000000e+00 : f32
    %28 = vector.broadcast %cst_27 : f32 to vector<80x16xf32>
    %c3_28 = arith.constant 3 : index
    %c7 = arith.constant 7 : index
    %c0_29 = arith.constant 0 : index
    %29 = vector.load %arg8[%c3_28, %c7, %c0_29] : memref<4x112x8xbf16, #tpu.memory_space<vmem>>, vector<1x80x8xbf16>
    %30 = vector.shape_cast %29 : vector<1x80x8xbf16> to vector<80x8xbf16>
    %c0_30 = arith.constant 0 : index
    %c0_31 = arith.constant 0 : index
    %c0_32 = arith.constant 0 : index
    %31 = vector.load %arg5[%c0_30, %c0_31, %c0_32] : memref<16x8x16xbf16, #tpu.memory_space<vmem>>, vector<1x8x16xbf16>
    %32 = vector.shape_cast %31 : vector<1x8x16xbf16> to vector<8x16xbf16>
    %cst_33 = arith.constant dense<0.000000e+00> : vector<80x16xf32>
    %33 = tpu.matmul %30, %32, %cst_33 {dimension_numbers = #tpu.dot_dimension_numbers<[1], [0], [0], [1], [0, 0, 1, 1], [], []>} : vector<80x8xbf16>, vector<8x16xbf16>, vector<80x16xf32> -> vector<80x16xf32>
    %34 = arith.addf %28, %33 : vector<80x16xf32>
    %c2_34 = arith.constant 2 : index
    %c8_35 = arith.constant 8 : index
    %c0_36 = arith.constant 0 : index
    %35 = vector.load %arg8[%c2_34, %c8_35, %c0_36] : memref<4x112x8xbf16, #tpu.memory_space<vmem>>, vector<1x80x8xbf16>
    %36 = vector.shape_cast %35 : vector<1x80x8xbf16> to vector<80x8xbf16>
    %c1_37 = arith.constant 1 : index
    %c0_38 = arith.constant 0 : index
    %c0_39 = arith.constant 0 : index
    %37 = vector.load %arg5[%c1_37, %c0_38, %c0_39] : memref<16x8x16xbf16, #tpu.memory_space<vmem>>, vector<1x8x16xbf16>
    %38 = vector.shape_cast %37 : vector<1x8x16xbf16> to vector<8x16xbf16>
    %cst_40 = arith.constant dense<0.000000e+00> : vector<80x16xf32>
    %39 = tpu.matmul %36, %38, %cst_40 {dimension_numbers = #tpu.dot_dimension_numbers<[1], [0], [0], [1], [0, 0, 1, 1], [], []>} : vector<80x8xbf16>, vector<8x16xbf16>, vector<80x16xf32> -> vector<80x16xf32>
    %40 = arith.addf %34, %39 : vector<80x16xf32>
    %c3_41 = arith.constant 3 : index
    %c8_42 = arith.constant 8 : index
    %c0_43 = arith.constant 0 : index
    %41 = vector.load %arg8[%c3_41, %c8_42, %c0_43] : memref<4x112x8xbf16, #tpu.memory_space<vmem>>, vector<1x80x8xbf16>
    %42 = vector.shape_cast %41 : vector<1x80x8xbf16> to vector<80x8xbf16>
    %c2_44 = arith.constant 2 : index
    %c0_45 = arith.constant 0 : index
    %c0_46 = arith.constant 0 : index
    %43 = vector.load %arg5[%c2_44, %c0_45, %c0_46] : memref<16x8x16xbf16, #tpu.memory_space<vmem>>, vector<1x8x16xbf16>
    %44 = vector.shape_cast %43 : vector<1x8x16xbf16> to vector<8x16xbf16>
    %cst_47 = arith.constant dense<0.000000e+00> : vector<80x16xf32>
    %45 = tpu.matmul %42, %44, %cst_47 {dimension_numbers = #tpu.dot_dimension_numbers<[1], [0], [0], [1], [0, 0, 1, 1], [], []>} : vector<80x8xbf16>, vector<8x16xbf16>, vector<80x16xf32> -> vector<80x16xf32>
    %46 = arith.addf %40, %45 : vector<80x16xf32>
    %c2_48 = arith.constant 2 : index
    %c9 = arith.constant 9 : index
    %c0_49 = arith.constant 0 : index
    %47 = vector.load %arg8[%c2_48, %c9, %c0_49] : memref<4x112x8xbf16, #tpu.memory_space<vmem>>, vector<1x80x8xbf16>
    %48 = vector.shape_cast %47 : vector<1x80x8xbf16> to vector<80x8xbf16>
    %c3_50 = arith.constant 3 : index
    %c0_51 = arith.constant 0 : index
    %c0_52 = arith.constant 0 : index
    %49 = vector.load %arg5[%c3_50, %c0_51, %c0_52] : memref<16x8x16xbf16, #tpu.memory_space<vmem>>, vector<1x8x16xbf16>
    %50 = vector.shape_cast %49 : vector<1x8x16xbf16> to vector<8x16xbf16>
    %cst_53 = arith.constant dense<0.000000e+00> : vector<80x16xf32>
    %51 = tpu.matmul %48, %50, %cst_53 {dimension_numbers = #tpu.dot_dimension_numbers<[1], [0], [0], [1], [0, 0, 1, 1], [], []>} : vector<80x8xbf16>, vector<8x16xbf16>, vector<80x16xf32> -> vector<80x16xf32>
    %52 = arith.addf %46, %51 : vector<80x16xf32>
    %c1_54 = arith.constant 1 : index
    %c17 = arith.constant 17 : index
    %c0_55 = arith.constant 0 : index
    %53 = vector.load %arg8[%c1_54, %c17, %c0_55] : memref<4x112x8xbf16, #tpu.memory_space<vmem>>, vector<1x80x8xbf16>
    %54 = vector.shape_cast %53 : vector<1x80x8xbf16> to vector<80x8xbf16>
    %c4_56 = arith.constant 4 : index
    %c0_57 = arith.constant 0 : index
    %c0_58 = arith.constant 0 : index
    %55 = vector.load %arg5[%c4_56, %c0_57, %c0_58] : memref<16x8x16xbf16, #tpu.memory_space<vmem>>, vector<1x8x16xbf16>
    %56 = vector.shape_cast %55 : vector<1x8x16xbf16> to vector<8x16xbf16>
    %cst_59 = arith.constant dense<0.000000e+00> : vector<80x16xf32>
    %57 = tpu.matmul %54, %56, %cst_59 {dimension_numbers = #tpu.dot_dimension_numbers<[1], [0], [0], [1], [0, 0, 1, 1], [], []>} : vector<80x8xbf16>, vector<8x16xbf16>, vector<80x16xf32> -> vector<80x16xf32>
    %58 = arith.addf %52, %57 : vector<80x16xf32>
    %c0_60 = arith.constant 0 : index
    %c18 = arith.constant 18 : index
    %c0_61 = arith.constant 0 : index
    %59 = vector.load %arg8[%c0_60, %c18, %c0_61] : memref<4x112x8xbf16, #tpu.memory_space<vmem>>, vector<1x80x8xbf16>
    %60 = vector.shape_cast %59 : vector<1x80x8xbf16> to vector<80x8xbf16>
    %c5 = arith.constant 5 : index
    %c0_62 = arith.constant 0 : index
    %c0_63 = arith.constant 0 : index
    %61 = vector.load %arg5[%c5, %c0_62, %c0_63] : memref<16x8x16xbf16, #tpu.memory_space<vmem>>, vector<1x8x16xbf16>
    %62 = vector.shape_cast %61 : vector<1x8x16xbf16> to vector<8x16xbf16>
    %cst_64 = arith.constant dense<0.000000e+00> : vector<80x16xf32>
    %63 = tpu.matmul %60, %62, %cst_64 {dimension_numbers = #tpu.dot_dimension_numbers<[1], [0], [0], [1], [0, 0, 1, 1], [], []>} : vector<80x8xbf16>, vector<8x16xbf16>, vector<80x16xf32> -> vector<80x16xf32>
    %64 = arith.addf %58, %63 : vector<80x16xf32>
    %c1_65 = arith.constant 1 : index
    %c18_66 = arith.constant 18 : index
    %c0_67 = arith.constant 0 : index
    %65 = vector.load %arg8[%c1_65, %c18_66, %c0_67] : memref<4x112x8xbf16, #tpu.memory_space<vmem>>, vector<1x80x8xbf16>
    %66 = vector.shape_cast %65 : vector<1x80x8xbf16> to vector<80x8xbf16>
    %c6 = arith.constant 6 : index
    %c0_68 = arith.constant 0 : index
    %c0_69 = arith.constant 0 : index
    %67 = vector.load %arg5[%c6, %c0_68, %c0_69] : memref<16x8x16xbf16, #tpu.memory_space<vmem>>, vector<1x8x16xbf16>
    %68 = vector.shape_cast %67 : vector<1x8x16xbf16> to vector<8x16xbf16>
    %cst_70 = arith.constant dense<0.000000e+00> : vector<80x16xf32>
    %69 = tpu.matmul %66, %68, %cst_70 {dimension_numbers = #tpu.dot_dimension_numbers<[1], [0], [0], [1], [0, 0, 1, 1], [], []>} : vector<80x8xbf16>, vector<8x16xbf16>, vector<80x16xf32> -> vector<80x16xf32>
    %70 = arith.addf %64, %69 : vector<80x16xf32>
    %c0_71 = arith.constant 0 : index
    %c19 = arith.constant 19 : index
    %c0_72 = arith.constant 0 : index
    %71 = vector.load %arg8[%c0_71, %c19, %c0_72] : memref<4x112x8xbf16, #tpu.memory_space<vmem>>, vector<1x80x8xbf16>
    %72 = vector.shape_cast %71 : vector<1x80x8xbf16> to vector<80x8xbf16>
    %c7_73 = arith.constant 7 : index
    %c0_74 = arith.constant 0 : index
    %c0_75 = arith.constant 0 : index
    %73 = vector.load %arg5[%c7_73, %c0_74, %c0_75] : memref<16x8x16xbf16, #tpu.memory_space<vmem>>, vector<1x8x16xbf16>
    %74 = vector.shape_cast %73 : vector<1x8x16xbf16> to vector<8x16xbf16>
    %cst_76 = arith.constant dense<0.000000e+00> : vector<80x16xf32>
    %75 = tpu.matmul %72, %74, %cst_76 {dimension_numbers = #tpu.dot_dimension_numbers<[1], [0], [0], [1], [0, 0, 1, 1], [], []>} : vector<80x8xbf16>, vector<8x16xbf16>, vector<80x16xf32> -> vector<80x16xf32>
    %76 = arith.addf %70, %75 : vector<80x16xf32>
    %c3_77 = arith.constant 3 : index
    %c17_78 = arith.constant 17 : index
    %c0_79 = arith.constant 0 : index
    %77 = vector.load %arg8[%c3_77, %c17_78, %c0_79] : memref<4x112x8xbf16, #tpu.memory_space<vmem>>, vector<1x80x8xbf16>
    %78 = vector.shape_cast %77 : vector<1x80x8xbf16> to vector<80x8xbf16>
    %c8_80 = arith.constant 8 : index
    %c0_81 = arith.constant 0 : index
    %c0_82 = arith.constant 0 : index
    %79 = vector.load %arg5[%c8_80, %c0_81, %c0_82] : memref<16x8x16xbf16, #tpu.memory_space<vmem>>, vector<1x8x16xbf16>
    %80 = vector.shape_cast %79 : vector<1x8x16xbf16> to vector<8x16xbf16>
    %cst_83 = arith.constant dense<0.000000e+00> : vector<80x16xf32>
    %81 = tpu.matmul %78, %80, %cst_83 {dimension_numbers = #tpu.dot_dimension_numbers<[1], [0], [0], [1], [0, 0, 1, 1], [], []>} : vector<80x8xbf16>, vector<8x16xbf16>, vector<80x16xf32> -> vector<80x16xf32>
    %82 = arith.addf %76, %81 : vector<80x16xf32>
    %c2_84 = arith.constant 2 : index
    %c18_85 = arith.constant 18 : index
    %c0_86 = arith.constant 0 : index
    %83 = vector.load %arg8[%c2_84, %c18_85, %c0_86] : memref<4x112x8xbf16, #tpu.memory_space<vmem>>, vector<1x80x8xbf16>
    %84 = vector.shape_cast %83 : vector<1x80x8xbf16> to vector<80x8xbf16>
    %c9_87 = arith.constant 9 : index
    %c0_88 = arith.constant 0 : index
    %c0_89 = arith.constant 0 : index
    %85 = vector.load %arg5[%c9_87, %c0_88, %c0_89] : memref<16x8x16xbf16, #tpu.memory_space<vmem>>, vector<1x8x16xbf16>
    %86 = vector.shape_cast %85 : vector<1x8x16xbf16> to vector<8x16xbf16>
    %cst_90 = arith.constant dense<0.000000e+00> : vector<80x16xf32>
    %87 = tpu.matmul %84, %86, %cst_90 {dimension_numbers = #tpu.dot_dimension_numbers<[1], [0], [0], [1], [0, 0, 1, 1], [], []>} : vector<80x8xbf16>, vector<8x16xbf16>, vector<80x16xf32> -> vector<80x16xf32>
    %88 = arith.addf %82, %87 : vector<80x16xf32>
    %c3_91 = arith.constant 3 : index
    %c18_92 = arith.constant 18 : index
    %c0_93 = arith.constant 0 : index
    %89 = vector.load %arg8[%c3_91, %c18_92, %c0_93] : memref<4x112x8xbf16, #tpu.memory_space<vmem>>, vector<1x80x8xbf16>
    %90 = vector.shape_cast %89 : vector<1x80x8xbf16> to vector<80x8xbf16>
    %c10 = arith.constant 10 : index
    %c0_94 = arith.constant 0 : index
    %c0_95 = arith.constant 0 : index
    %91 = vector.load %arg5[%c10, %c0_94, %c0_95] : memref<16x8x16xbf16, #tpu.memory_space<vmem>>, vector<1x8x16xbf16>
    %92 = vector.shape_cast %91 : vector<1x8x16xbf16> to vector<8x16xbf16>
    %cst_96 = arith.constant dense<0.000000e+00> : vector<80x16xf32>
    %93 = tpu.matmul %90, %92, %cst_96 {dimension_numbers = #tpu.dot_dimension_numbers<[1], [0], [0], [1], [0, 0, 1, 1], [], []>} : vector<80x8xbf16>, vector<8x16xbf16>, vector<80x16xf32> -> vector<80x16xf32>
    %94 = arith.addf %88, %93 : vector<80x16xf32>
    %c2_97 = arith.constant 2 : index
    %c19_98 = arith.constant 19 : index
    %c0_99 = arith.constant 0 : index
    %95 = vector.load %arg8[%c2_97, %c19_98, %c0_99] : memref<4x112x8xbf16, #tpu.memory_space<vmem>>, vector<1x80x8xbf16>
    %96 = vector.shape_cast %95 : vector<1x80x8xbf16> to vector<80x8xbf16>
    %c11 = arith.constant 11 : index
    %c0_100 = arith.constant 0 : index
    %c0_101 = arith.constant 0 : index
    %97 = vector.load %arg5[%c11, %c0_100, %c0_101] : memref<16x8x16xbf16, #tpu.memory_space<vmem>>, vector<1x8x16xbf16>
    %98 = vector.shape_cast %97 : vector<1x8x16xbf16> to vector<8x16xbf16>
    %cst_102 = arith.constant dense<0.000000e+00> : vector<80x16xf32>
    %99 = tpu.matmul %96, %98, %cst_102 {dimension_numbers = #tpu.dot_dimension_numbers<[1], [0], [0], [1], [0, 0, 1, 1], [], []>} : vector<80x8xbf16>, vector<8x16xbf16>, vector<80x16xf32> -> vector<80x16xf32>
    %100 = arith.addf %94, %99 : vector<80x16xf32>
    %c1_103 = arith.constant 1 : index
    %c27 = arith.constant 27 : index
    %c0_104 = arith.constant 0 : index
    %101 = vector.load %arg8[%c1_103, %c27, %c0_104] : memref<4x112x8xbf16, #tpu.memory_space<vmem>>, vector<1x80x8xbf16>
    %102 = vector.shape_cast %101 : vector<1x80x8xbf16> to vector<80x8xbf16>
    %c12 = arith.constant 12 : index
    %c0_105 = arith.constant 0 : index
    %c0_106 = arith.constant 0 : index
    %103 = vector.load %arg5[%c12, %c0_105, %c0_106] : memref<16x8x16xbf16, #tpu.memory_space<vmem>>, vector<1x8x16xbf16>
    %104 = vector.shape_cast %103 : vector<1x8x16xbf16> to vector<8x16xbf16>
    %cst_107 = arith.constant dense<0.000000e+00> : vector<80x16xf32>
    %105 = tpu.matmul %102, %104, %cst_107 {dimension_numbers = #tpu.dot_dimension_numbers<[1], [0], [0], [1], [0, 0, 1, 1], [], []>} : vector<80x8xbf16>, vector<8x16xbf16>, vector<80x16xf32> -> vector<80x16xf32>
    %106 = arith.addf %100, %105 : vector<80x16xf32>
    %c0_108 = arith.constant 0 : index
    %c28 = arith.constant 28 : index
    %c0_109 = arith.constant 0 : index
    %107 = vector.load %arg8[%c0_108, %c28, %c0_109] : memref<4x112x8xbf16, #tpu.memory_space<vmem>>, vector<1x80x8xbf16>
    %108 = vector.shape_cast %107 : vector<1x80x8xbf16> to vector<80x8xbf16>
    %c13 = arith.constant 13 : index
    %c0_110 = arith.constant 0 : index
    %c0_111 = arith.constant 0 : index
    %109 = vector.load %arg5[%c13, %c0_110, %c0_111] : memref<16x8x16xbf16, #tpu.memory_space<vmem>>, vector<1x8x16xbf16>
    %110 = vector.shape_cast %109 : vector<1x8x16xbf16> to vector<8x16xbf16>
    %cst_112 = arith.constant dense<0.000000e+00> : vector<80x16xf32>
    %111 = tpu.matmul %108, %110, %cst_112 {dimension_numbers = #tpu.dot_dimension_numbers<[1], [0], [0], [1], [0, 0, 1, 1], [], []>} : vector<80x8xbf16>, vector<8x16xbf16>, vector<80x16xf32> -> vector<80x16xf32>
    %112 = arith.addf %106, %111 : vector<80x16xf32>
    %c1_113 = arith.constant 1 : index
    %c28_114 = arith.constant 28 : index
    %c0_115 = arith.constant 0 : index
    %113 = vector.load %arg8[%c1_113, %c28_114, %c0_115] : memref<4x112x8xbf16, #tpu.memory_space<vmem>>, vector<1x80x8xbf16>
    %114 = vector.shape_cast %113 : vector<1x80x8xbf16> to vector<80x8xbf16>
    %c14 = arith.constant 14 : index
    %c0_116 = arith.constant 0 : index
    %c0_117 = arith.constant 0 : index
    %115 = vector.load %arg5[%c14, %c0_116, %c0_117] : memref<16x8x16xbf16, #tpu.memory_space<vmem>>, vector<1x8x16xbf16>
    %116 = vector.shape_cast %115 : vector<1x8x16xbf16> to vector<8x16xbf16>
    %cst_118 = arith.constant dense<0.000000e+00> : vector<80x16xf32>
    %117 = tpu.matmul %114, %116, %cst_118 {dimension_numbers = #tpu.dot_dimension_numbers<[1], [0], [0], [1], [0, 0, 1, 1], [], []>} : vector<80x8xbf16>, vector<8x16xbf16>, vector<80x16xf32> -> vector<80x16xf32>
    %118 = arith.addf %112, %117 : vector<80x16xf32>
    %c0_119 = arith.constant 0 : index
    %c29 = arith.constant 29 : index
    %c0_120 = arith.constant 0 : index
    %119 = vector.load %arg8[%c0_119, %c29, %c0_120] : memref<4x112x8xbf16, #tpu.memory_space<vmem>>, vector<1x80x8xbf16>
    %120 = vector.shape_cast %119 : vector<1x80x8xbf16> to vector<80x8xbf16>
    %c15 = arith.constant 15 : index
    %c0_121 = arith.constant 0 : index
    %c0_122 = arith.constant 0 : index
    %121 = vector.load %arg5[%c15, %c0_121, %c0_122] : memref<16x8x16xbf16, #tpu.memory_space<vmem>>, vector<1x8x16xbf16>
    %122 = vector.shape_cast %121 : vector<1x8x16xbf16> to vector<8x16xbf16>
    %cst_123 = arith.constant dense<0.000000e+00> : vector<80x16xf32>
    %123 = tpu.matmul %120, %122, %cst_123 {dimension_numbers = #tpu.dot_dimension_numbers<[1], [0], [0], [1], [0, 0, 1, 1], [], []>} : vector<80x8xbf16>, vector<8x16xbf16>, vector<80x16xf32> -> vector<80x16xf32>
    %124 = arith.addf %118, %123 : vector<80x16xf32>
    %c0_124 = arith.constant 0 : index
    %c0_125 = arith.constant 0 : index
    %125 = vector.load %arg6[%c0_124, %c0_125] : memref<1x16xf32, #tpu.memory_space<vmem>>, vector<1x16xf32>
    %126 = vector.broadcast %125 : vector<1x16xf32> to vector<80x16xf32>
    %127 = arith.addf %124, %126 : vector<80x16xf32>
    %cst_126 = arith.constant 0.000000e+00 : f32
    %128 = vector.broadcast %cst_126 : f32 to vector<80x16xf32>
    %129 = arith.maximumf %127, %128 : vector<80x16xf32>
    %c0_127 = arith.constant 0 : index
    %c0_128 = arith.constant 0 : index
    %c0_129 = arith.constant 0 : index
    %c0_130 = arith.constant 0 : index
    %130 = vector.load %arg7[%c0_127, %c0_128, %c0_129, %c0_130] : memref<1x1x80x16xf32, #tpu.memory_space<vmem>>, vector<1x1x80x16xf32>
    %131 = vector.shape_cast %130 : vector<1x1x80x16xf32> to vector<80x16xf32>
    %132 = vector.shape_cast %129 : vector<80x16xf32> to vector<1x1x80x16xf32>
    tpu.vector_store %arg7[%c0_127, %c0_128, %c0_129, %c0_130], %132 {strides = array<i32>} : memref<1x1x80x16xf32, #tpu.memory_space<vmem>>, vector<1x1x80x16xf32>,
    return
  }
  func.func @transform_0(%arg0: i32, %arg1: i32) -> (i32, i32, i32, i32) {
    %c0_i32 = arith.constant 0 : i32
    %c0_i32_0 = arith.constant 0 : i32
    %c0_i32_1 = arith.constant 0 : i32
    return %arg0, %arg1, %c0_i32, %c0_i32_0 : i32, i32, i32, i32
  }
  func.func @transform_1(%arg0: i32, %arg1: i32) -> (i32, i32, i32, i32, i32) {
    %c0_i32 = arith.constant 0 : i32
    %c0_i32_0 = arith.constant 0 : i32
    %c0_i32_1 = arith.constant 0 : i32
    %c0_i32_2 = arith.constant 0 : i32
    return %arg0, %arg1, %c0_i32, %c0_i32_0, %c0_i32_1 : i32, i32, i32, i32, i32
  }
  func.func @transform_2(%arg0: i32, %arg1: i32) -> (i32, i32) {
    %c0_i32 = arith.constant 0 : i32
    %c0_i32_0 = arith.constant 0 : i32
    %c0_i32_1 = arith.constant 0 : i32
    return %c0_i32, %c0_i32_0 : i32, i32
  }
  func.func @transform_3(%arg0: i32, %arg1: i32) -> (i32, i32, i32) {
    %c0_i32 = arith.constant 0 : i32
    %c0_i32_0 = arith.constant 0 : i32
    %c0_i32_1 = arith.constant 0 : i32
    %c0_i32_2 = arith.constant 0 : i32
    return %c0_i32, %c0_i32_0, %c0_i32_1 : i32, i32, i32
  }
  func.func @transform_4(%arg0: i32, %arg1: i32) -> (i32, i32) {
    %c0_i32 = arith.constant 0 : i32
    %c0_i32_0 = arith.constant 0 : i32
    %c0_i32_1 = arith.constant 0 : i32
    return %c0_i32, %c0_i32_0 : i32, i32
  }
  func.func @transform_5(%arg0: i32, %arg1: i32) -> (i32, i32, i32, i32) {
    %c0_i32 = arith.constant 0 : i32
    %c0_i32_0 = arith.constant 0 : i32
    %c0_i32_1 = arith.constant 0 : i32
    return %arg0, %arg1, %c0_i32, %c0_i32_0 : i32, i32, i32, i32
  }
}

</mosaic_0001>

<llo_original>
// kernel: tile.0
$region0: #{tile.0}
  %s0 = inlined_call_operand.vmem [shape: bf16[4,4], index: 0, kind: input, shape index: {}]
  %s1 = inlined_call_operand.vmem [shape: bf16[1,16], index: 1, kind: output, shape index: {}]
  $region1: #{tile.0} parent=0
    #allocation0 [shape = 'u8[4096]{0}', space=vmem, size = 0x1000, scoped, tag = 'scoped mem for output reshape']
    #allocation1 [shape = 'u8[4096]{0}', space=vmem, size = 0x1000, scoped, tag = 'scoped mem for input reshape']
    %s3 = ssub.s32 16, 1
    %s4 = sshrl.u32 %s3, 1
    %s5 = sor.u32 %s3, %s4
    %s6 = sand.u32 %s5, 85
    %s7 = sshrl.u32 %s6, 1
    %s8 = sor.u32 %s6, %s7
    %s9 = sand.u32 51, %s8
    %s10 = sshrl.u32 %s9, 2
    %s11 = sor.u32 %s9, %s10
    %s12 = sand.u32 15, %s11
    %v13 = vld [vmem:[%s0] sm:%s12]
    %v14 = vunpack.c.l.bf16 %v13
    %v15 = vunpack.c.h.bf16 %v13
    %16 = vst [vmem:[#allocation1] sm:%s3] %v14
    %v17 = vld [vmem:[#allocation1] sm:$0x1]
    %vm18 = vcmask 31744
    %19 = vst.msk [vmem:[#allocation0] sm:$0x1] %vm18, %v17
    %s20 = scalar_lea.vmem [#allocation1], 3
    %v21 = vld [vmem:[%s20] sm:$0x1]
    %22 = vrot.lane.b32.xlu0 %v21, 12
    %v23 = vpop.permute.xlu0 %22
    %vm24 = vcmask 130144
    %25 = vst.msk [vmem:[#allocation0] sm:$0x1] %vm24, %v23
    %s26 = scalar_lea.vmem [#allocation1], 2
    %v27 = vld [vmem:[%s26] sm:$0x1]
    %28 = vrot.lane.b32.xlu0 %v27, 8
    %v29 = vpop.permute.xlu0 %28
    %vm30 = vcmask 97344
    %31 = vst.msk [vmem:[#allocation0] sm:$0x1] %vm30, %v29
    %s32 = scalar_lea.vmem [#allocation1], 1
    %v33 = vld [vmem:[%s32] sm:$0x1]
    %34 = vrot.lane.b32.xlu0 %v33, 4
    %v35 = vpop.permute.xlu0 %34
    %vm36 = vcmask 64544
    %37 = vst.msk [vmem:[#allocation0] sm:$0x1] %vm36, %v35
    %s39 = ssub.s32 4, 1
    %v40 = vld [vmem:[#allocation0] sm:%s39]
    %v41 = vpack.c.bf16 0.0, %v40
    %s43 = ssub.s32 2, 1
    %44 = vst [vmem:[%s1] sm:%s43] %v41

// kernel: tile.18
$region0: #{tile.18}
  #allocation2 [shape = 's32[1]{0}', space=sflag, size = 0x4, scoped, tag = 'scoped memory for tile.18']
  %s0 = inlined_call_operand.hbm [shape: f32[4], index: 0, kind: input, shape index: {}]
  %s1 = inlined_call_operand.vmem [shape: f32[4,4], index: 1, kind: output, shape index: {}]
  $region1: #{tile.18} parent=0
    #allocation0 [shape = 'u8[512]{0}', space=vmem, size = 0x400, scoped, tag = 'operand span for operand 0']
    #allocation1 [shape = 's32[1]{0}', space=sflag, size = 0x4, scoped, tag = 'scoped memory for tile.18']
    %2 = vsyncpa [#allocation1], 0
    // Predicated region
    $region2: #{tile.18} parent=1 // pred_check
      _
    $region3: #{tile.18} parent=1 // pred_check_branch
      %4 = sbr.rel (0) target = $region5
    $region4: #{tile.18} parent=1 // pred_region
      %6 = vsyncadd [#allocation1], 0
      %s8 = sshll.u32 %s0, 4
      %s9 = int_to_ptr.hbm [resolvable:$true] %s8
      %s10 = sshll.u32 [#allocation0], 4
      %s11 = int_to_ptr.vmem [resolvable:$true] %s10
      %13 = dma.hbm_to_vmem [thread:$0]  %s9, 16, %s11, [#allocation1]
    $region5: #{tile.18} parent=1 // pred_fallthru
      _
    // Predicated region
    $region6: #{tile.18} parent=1 // pred_check
      _
    $region7: #{tile.18} parent=1 // pred_check_branch
      %15 = sbr.rel (0) target = $region9
    $region8: #{tile.18} parent=1 // pred_region
      %17 = dma.done [#allocation1], 16
    $region9: #{tile.18} parent=1 // pred_fallthru
      _
    %v18 = vld [vmem:[#allocation0] ss:$0 sm:$0xff]
    %19 = vst [vmem:[%s1] sm:$0xf] %v18
    %20 = vsyncpa [#allocation1], 1

// kernel: tile.19
$region0: #{tile.19}
  %s0 = inlined_call_operand.vmem [shape: f32[4,4], index: 0, kind: input, shape index: {}]
  %s1 = inlined_call_operand.vmem [shape: f32[1,16], index: 1, kind: output, shape index: {}]
  $region1: #{tile.19} parent=0
    #allocation0 [shape = 'u8[4096]{0}', space=vmem, size = 0x1000, scoped, tag = 'scoped mem for output reshape']
    #allocation1 [shape = 'u8[4096]{0}', space=vmem, size = 0x1000, scoped, tag = 'scoped mem for input reshape']
    %s3 = ssub.s32 16, 1
    %v4 = vld [vmem:[%s0] sm:%s3]
    %5 = vst [vmem:[#allocation1] sm:%s3] %v4
    %v6 = vld [vmem:[#allocation1] sm:$0x1]
    %vm7 = vcmask 31744
    %8 = vst.msk [vmem:[#allocation0] sm:$0x1] %vm7, %v6
    %s9 = scalar_lea.vmem [#allocation1], 3
    %v10 = vld [vmem:[%s9] sm:$0x1]
    %11 = vrot.lane.b32.xlu0 %v10, 12
    %v12 = vpop.permute.xlu0 %11
    %vm13 = vcmask 130144
    %14 = vst.msk [vmem:[#allocation0] sm:$0x1] %vm13, %v12
    %s15 = scalar_lea.vmem [#allocation1], 2
    %v16 = vld [vmem:[%s15] sm:$0x1]
    %17 = vrot.lane.b32.xlu0 %v16, 8
    %v18 = vpop.permute.xlu0 %17
    %vm19 = vcmask 97344
    %20 = vst.msk [vmem:[#allocation0] sm:$0x1] %vm19, %v18
    %s21 = scalar_lea.vmem [#allocation1], 1
    %v22 = vld [vmem:[%s21] sm:$0x1]
    %23 = vrot.lane.b32.xlu0 %v22, 4
    %v24 = vpop.permute.xlu0 %23
    %vm25 = vcmask 64544
    %26 = vst.msk [vmem:[#allocation0] sm:$0x1] %vm25, %v24
    %s28 = ssub.s32 2, 1
    %v29 = vld [vmem:[#allocation0] sm:%s28]
    %s31 = ssub.s32 2, 1
    %32 = vst [vmem:[%s1] sm:%s31] %v29

// kernel: decoder_forward.1
$region0: #{decoder_forward.1}
  #allocation0 [shape = 'u32[]', space=smem, size = 0x4, offset = 0x4, fixed_abs, tag = 'smem constant byte address 0x4 - core index']
  #allocation1 [shape = 'u32[72,128]{1,0:T(1,128)}', space=vmem, size = 0x9000, scoped, tag = 'internal scratch']
  #allocation2 [shape = 'bf16[4,112,8]{2,1,0:T(8,128)(2,1)}', space=vmem, size = 0x1c000, scoped, tag = 'scratch operand']
  %s0 = inlined_call_operand.vmem [shape: bf16[2,1,100,9], index: 0, kind: input, shape index: {}]
  %s1 = inlined_call_operand.vmem [shape: bf16[2,1,4,100,4], index: 1, kind: input, shape index: {}]
  %s2 = inlined_call_operand.vmem [shape: bf16[9,16], index: 2, kind: input, shape index: {}]
  %s3 = inlined_call_operand.vmem [shape: bf16[16,8,16], index: 3, kind: input, shape index: {}]
  %s4 = inlined_call_operand.vmem [shape: f32[1,16], index: 4, kind: input, shape index: {}]
  %s5 = inlined_call_operand.vmem [shape: f32[2,1,80,16], index: 5, kind: output, shape index: {}]
  %s6 = sld [smem:[#allocation0]]
  $region53: #{decoder_forward.1} parent=0
    _
  %s8 = ssub.s32 1, %s6
  %s9 = scalar_select 0, %s8, %s6
  loop: start=0, step=1, limit=4
  $region2: #{decoder_forward.1} parent=0 // loop_pre_header
    _
  $region3: #{decoder_forward.1} parent=0 // loop_header
    %s11 = sphi 0, %s15
    %p12 = scmp.ge.s32.totalorder %s11, 4
    %s18 = sphi 0, %s30
    %s19 = sphi 0, %s26
    %s20 = sphi 0, %s18
    %s21 = sphi 0, %s19
    %s22 = sphi 0, %s20
    %s23 = sphi 0, %s21
    %s35 = sphi 0, %s37
    %s38 = sphi 0, %s35
    %s39 = sphi 0, %s38
    %s55 = sphi 0, %s39
    %s63 = sphi 0, %s65
    %s66 = sphi 0, %s63
    %s67 = sphi 0, %s66
    %s83 = sphi 0, %s67
    %s87 = sphi 0, %s87
    %s89 = sphi 0, %s87
    %s90 = sphi 0, %s89
    %s104 = sphi 0, %s90
    %s108 = sphi 0, %s108
    %s110 = sphi 0, %s108
    %s111 = sphi 0, %s110
    %s125 = sphi 0, %s111
    %s129 = sphi 0, %s129
    %s131 = sphi 0, %s129
    %s132 = sphi 0, %s131
    %s146 = sphi 0, %s132
    %s154 = sphi 0, %s156
    %s157 = sphi 0, %s154
    %s158 = sphi 0, %s157
    %s174 = sphi 0, %s158
  $region4: #{decoder_forward.1} parent=0 // loop_header_branch
    %14 = sbr.rel (%p12) target = $region8
  $region5: #{decoder_forward.1} parent=0 // loop_body
    %s16 = ssub.s32 %s11, 1
    %s17 = ssub.s32 %s11, 2
    %s24 = sadd.s32 1, %s19
    %p25 = scmp.ge.s32.totalorder %s24, 1
    %s26 = scalar_select %p25, 0, %s24
    %s27 = sadd.s32 1, %s18
    %s28 = scalar_select %p25, %s27, %s18
    %p29 = scmp.ge.s32.totalorder %s28, 2
    %s30 = scalar_select %p29, 0, %s28
    %s31 = ssub.s32 %s18, %s30
    %s32 = ssub.s32 %s19, %s26
    %s33 = sor.u32 %s31, %s32
    %p34 = scmp.eq.s32.totalorder %s33, 0
    %s36 = sadd.s32 %s35, 1
    %s37 = scalar_select %p34, %s35, %s36
    %p40 = pneg %p34
    %p41 = scmp.eq.s32.totalorder %s11, 1
    %p42 = por %p40, %p41
    %p43 = scmp.ne.s32.totalorder %s35, %s38
    %p44 = scmp.eq.s32.totalorder %s11, 0
    %p45 = por %p43, %p44
    %p46 = scmp.ne.s32.totalorder %s35, %s38
    %p47 = scmp.eq.s32.totalorder %s16, 1
    %p48 = por %p46, %p47
    %p49 = scmp.ne.s32.totalorder %s38, %s39
    %p50 = scmp.eq.s32.totalorder %s16, 0
    %p51 = por %p49, %p50
    %p52 = scmp.ne.s32.totalorder %s38, %s39
    %p53 = scmp.eq.s32.totalorder %s17, 1
    %p54 = por %p52, %p53
    %p56 = scmp.ne.s32.totalorder %s39, %s55
    %p57 = scmp.eq.s32.totalorder %s17, 0
    %p58 = por %p56, %p57
    %s59 = ssub.s32 %s18, %s30
    %s60 = ssub.s32 %s19, %s26
    %s61 = sor.u32 %s59, %s60
    %p62 = scmp.eq.s32.totalorder %s61, 0
    %s64 = sadd.s32 %s63, 1
    %s65 = scalar_select %p62, %s63, %s64
    %p68 = pneg %p62
    %p69 = scmp.eq.s32.totalorder %s11, 1
    %p70 = por %p68, %p69
    %p71 = scmp.ne.s32.totalorder %s63, %s66
    %p72 = scmp.eq.s32.totalorder %s11, 0
    %p73 = por %p71, %p72
    %p74 = scmp.ne.s32.totalorder %s63, %s66
    %p75 = scmp.eq.s32.totalorder %s16, 1
    %p76 = por %p74, %p75
    %p77 = scmp.ne.s32.totalorder %s66, %s67
    %p78 = scmp.eq.s32.totalorder %s16, 0
    %p79 = por %p77, %p78
    %p80 = scmp.ne.s32.totalorder %s66, %s67
    %p81 = scmp.eq.s32.totalorder %s17, 1
    %p82 = por %p80, %p81
    %p84 = scmp.ne.s32.totalorder %s67, %s83
    %p85 = scmp.eq.s32.totalorder %s17, 0
    %p86 = por %p84, %p85
    %s88 = sadd.s32 %s87, 1
    %p91 = scmp.eq.s32.totalorder %s11, 1
    %p92 = scmp.ne.s32.totalorder %s87, %s89
    %p93 = scmp.eq.s32.totalorder %s11, 0
    %p94 = por %p92, %p93
    %p95 = scmp.ne.s32.totalorder %s87, %s89
    %p96 = scmp.eq.s32.totalorder %s16, 1
    %p97 = por %p95, %p96
    %p98 = scmp.ne.s32.totalorder %s89, %s90
    %p99 = scmp.eq.s32.totalorder %s16, 0
    %p100 = por %p98, %p99
    %p101 = scmp.ne.s32.totalorder %s89, %s90
    %p102 = scmp.eq.s32.totalorder %s17, 1
    %p103 = por %p101, %p102
    %p105 = scmp.ne.s32.totalorder %s90, %s104
    %p106 = scmp.eq.s32.totalorder %s17, 0
    %p107 = por %p105, %p106
    %s109 = sadd.s32 %s108, 1
    %p112 = scmp.eq.s32.totalorder %s11, 1
    %p113 = scmp.ne.s32.totalorder %s108, %s110
    %p114 = scmp.eq.s32.totalorder %s11, 0
    %p115 = por %p113, %p114
    %p116 = scmp.ne.s32.totalorder %s108, %s110
    %p117 = scmp.eq.s32.totalorder %s16, 1
    %p118 = por %p116, %p117
    %p119 = scmp.ne.s32.totalorder %s110, %s111
    %p120 = scmp.eq.s32.totalorder %s16, 0
    %p121 = por %p119, %p120
    %p122 = scmp.ne.s32.totalorder %s110, %s111
    %p123 = scmp.eq.s32.totalorder %s17, 1
    %p124 = por %p122, %p123
    %p126 = scmp.ne.s32.totalorder %s111, %s125
    %p127 = scmp.eq.s32.totalorder %s17, 0
    %p128 = por %p126, %p127
    %s130 = sadd.s32 %s129, 1
    %p133 = scmp.eq.s32.totalorder %s11, 1
    %p134 = scmp.ne.s32.totalorder %s129, %s131
    %p135 = scmp.eq.s32.totalorder %s11, 0
    %p136 = por %p134, %p135
    %p137 = scmp.ne.s32.totalorder %s129, %s131
    %p138 = scmp.eq.s32.totalorder %s16, 1
    %p139 = por %p137, %p138
    %p140 = scmp.ne.s32.totalorder %s131, %s132
    %p141 = scmp.eq.s32.totalorder %s16, 0
    %p142 = por %p140, %p141
    %p143 = scmp.ne.s32.totalorder %s131, %s132
    %p144 = scmp.eq.s32.totalorder %s17, 1
    %p145 = por %p143, %p144
    %p147 = scmp.ne.s32.totalorder %s132, %s146
    %p148 = scmp.eq.s32.totalorder %s17, 0
    %p149 = por %p147, %p148
    %s150 = ssub.s32 %s18, %s30
    %s151 = ssub.s32 %s19, %s26
    %s152 = sor.u32 %s150, %s151
    %p153 = scmp.eq.s32.totalorder %s152, 0
    %s155 = sadd.s32 %s154, 1
    %s156 = scalar_select %p153, %s154, %s155
    %p159 = pneg %p153
    %p160 = scmp.eq.s32.totalorder %s11, 1
    %p161 = por %p159, %p160
    %p162 = scmp.ne.s32.totalorder %s154, %s157
    %p163 = scmp.eq.s32.totalorder %s11, 0
    %p164 = por %p162, %p163
    %p165 = scmp.ne.s32.totalorder %s154, %s157
    %p166 = scmp.eq.s32.totalorder %s16, 1
    %p167 = por %p165, %p166
    %p168 = scmp.ne.s32.totalorder %s157, %s158
    %p169 = scmp.eq.s32.totalorder %s16, 0
    %p170 = por %p168, %p169
    %p171 = scmp.ne.s32.totalorder %s157, %s158
    %p172 = scmp.eq.s32.totalorder %s17, 1
    %p173 = por %p171, %p172
    %p175 = scmp.ne.s32.totalorder %s158, %s174
    %p176 = scmp.eq.s32.totalorder %s17, 0
    %p177 = por %p175, %p176
    %p178 = scmp.le.s32.totalorder 1, %s11
    %p179 = scmp.lt.s32.totalorder %s11, 3
    %p180 = pnand %p178, %p179
    %p181 = pneg %p180
    // Predicated region
    $region9: #{decoder_forward.1} parent=5 // pred_check
      _
    $region10: #{decoder_forward.1} parent=5 // pred_check_branch
      %183 = sbr.rel (%p180) target = $region12
    $region11: #{decoder_forward.1} parent=5 // pred_region
      %s184 = ssub.s32 %s11, 1
      // Predicated region
      $region13: #{decoder_forward.1} parent=11 // pred_check
        %p185 = pneg %p100
      $region14: #{decoder_forward.1} parent=11 // pred_check_branch
        %187 = sbr.rel (%p185) target = $region16
      $region15: #{decoder_forward.1} parent=11 // pred_region
        _
      $region16: #{decoder_forward.1} parent=11 // pred_fallthru
        _
      // Predicated region
      $region17: #{decoder_forward.1} parent=11 // pred_check
        %p188 = pneg %p121
      $region18: #{decoder_forward.1} parent=11 // pred_check_branch
        %190 = sbr.rel (%p188) target = $region20
      $region19: #{decoder_forward.1} parent=11 // pred_region
        _
      $region20: #{decoder_forward.1} parent=11 // pred_fallthru
        _
      // Predicated region
      $region21: #{decoder_forward.1} parent=11 // pred_check
        %p191 = pneg %p142
      $region22: #{decoder_forward.1} parent=11 // pred_check_branch
        %193 = sbr.rel (%p191) target = $region24
      $region23: #{decoder_forward.1} parent=11 // pred_region
        _
      $region24: #{decoder_forward.1} parent=11 // pred_fallthru
        _
    $region12: #{decoder_forward.1} parent=5 // pred_fallthru
      _
    %p194 = scmp.lt.s32.totalorder %s11, 2
    // Predicated region
    $region25: #{decoder_forward.1} parent=5 // pred_check
      %p195 = pneg %p194
    $region26: #{decoder_forward.1} parent=5 // pred_check_branch
      %197 = sbr.rel (%p195) target = $region28
    $region27: #{decoder_forward.1} parent=5 // pred_region
      // Predicated region
      $region29: #{decoder_forward.1} parent=27 // pred_check
        %p198 = pneg %p45
      $region30: #{decoder_forward.1} parent=27 // pred_check_branch
        %200 = sbr.rel (%p198) target = $region32
      $region31: #{decoder_forward.1} parent=27 // pred_region
        %p201 = scmp.lt.s32.totalorder %s18, 1
        %s202 = scalar_select %p201, %s18, 1
        %p203 = scmp.lt.s32.totalorder %s19, 0
        %s204 = scalar_select %p203, %s19, 0
        %s205 = smul.addr %s204, 13
        %s206 = smul.addr %s202, 13
        %s207 = sadd.s32 %s205, %s206
        %s208 = smul.addr %s207, 4
        %s209 = scalar_lea.vmem %s0, %s208
      $region32: #{decoder_forward.1} parent=27 // pred_fallthru
        _
      // Predicated region
      $region33: #{decoder_forward.1} parent=27 // pred_check
        %p210 = pneg %p73
      $region34: #{decoder_forward.1} parent=27 // pred_check_branch
        %212 = sbr.rel (%p210) target = $region36
      $region35: #{decoder_forward.1} parent=27 // pred_region
        %p213 = scmp.lt.s32.totalorder %s18, 1
        %s214 = scalar_select %p213, %s18, 1
        %p215 = scmp.lt.s32.totalorder %s19, 0
        %s216 = scalar_select %p215, %s19, 0
        %s217 = smul.addr %s216, 52
        %s218 = smul.addr %s214, 52
        %s219 = sadd.s32 %s217, %s218
        %s220 = smul.addr %s219, 4
        %s221 = scalar_lea.vmem %s1, %s220
      $region36: #{decoder_forward.1} parent=27 // pred_fallthru
        _
    $region28: #{decoder_forward.1} parent=5 // pred_fallthru
      _
    %p222 = scmp.le.s32.totalorder 1, %s11
    %p223 = scmp.lt.s32.totalorder %s11, 3
    %p224 = pnand %p222, %p223
    %p225 = pneg %p224
    // Predicated region
    $region37: #{decoder_forward.1} parent=5 // pred_check
      _
    $region38: #{decoder_forward.1} parent=5 // pred_check_branch
      %227 = sbr.rel (%p224) target = $region40
    $region39: #{decoder_forward.1} parent=5 // pred_region
      %s228 = ssub.s32 %s11, 1
      %p229 = scmp.lt.s32.totalorder %s20, 1
      %s230 = scalar_select %p229, %s20, 1
      %p231 = scmp.lt.s32.totalorder %s21, 0
      %s232 = scalar_select %p231, %s21, 0
      %s233 = smul.addr %s232, 13
      %s234 = smul.addr %s230, 13
      %s235 = sadd.s32 %s233, %s234
      %s236 = smul.addr %s235, 4
      %s237 = scalar_lea.vmem %s0, %s236
      %p238 = pneg %p51
      %p239 = pneg %p48
      %p240 = scmp.lt.s32.totalorder %s20, 1
      %s241 = scalar_select %p240, %s20, 1
      %p242 = scmp.lt.s32.totalorder %s21, 0
      %s243 = scalar_select %p242, %s21, 0
      %s244 = smul.addr %s243, 52
      %s245 = smul.addr %s241, 52
      %s246 = sadd.s32 %s244, %s245
      %s247 = smul.addr %s246, 4
      %s248 = scalar_lea.vmem %s1, %s247
      %p249 = pneg %p79
      %p250 = pneg %p76
      %p251 = pneg %p100
      %p252 = pneg %p97
      %p253 = pneg %p121
      %p254 = pneg %p118
      %p255 = pneg %p142
      %p256 = pneg %p139
      %p257 = pneg %p170
      %p258 = pneg %p167
      %p259 = scmp.lt.s32.totalorder %s20, 1
      %s260 = scalar_select %p259, %s20, 1
      %p261 = scmp.lt.s32.totalorder %s21, 0
      %s262 = scalar_select %p261, %s21, 0
      %s263 = smul.addr %s262, 10
      %s264 = smul.addr %s260, 10
      %s265 = sadd.s32 %s263, %s264
      %s266 = smul.addr %s265, 8
      %s267 = scalar_lea.vmem %s5, %s266
      %p268 = scmp.lt.s32.totalorder %s20, 1
      %s269 = scalar_select %p268, %s20, 1
      %p270 = scmp.lt.s32.totalorder %s21, 0
      %s271 = scalar_select %p270, %s21, 0
      %s272 = smul.addr %s271, 13
      %s273 = smul.addr %s269, 13
      %s274 = sadd.s32 %s272, %s273
      %s275 = smul.addr %s274, 4
      %s276 = scalar_lea.vmem %s0, %s275
      %p277 = scmp.lt.s32.totalorder %s20, 1
      %s278 = scalar_select %p277, %s20, 1
      %p279 = scmp.lt.s32.totalorder %s21, 0
      %s280 = scalar_select %p279, %s21, 0
      %s281 = smul.addr %s280, 52
      %s282 = smul.addr %s278, 52
      %s283 = sadd.s32 %s281, %s282
      %s284 = smul.addr %s283, 4
      %s285 = scalar_lea.vmem %s1, %s284
      %p286 = scmp.lt.s32.totalorder %s20, 1
      %s287 = scalar_select %p286, %s20, 1
      %p288 = scmp.lt.s32.totalorder %s21, 0
      %s289 = scalar_select %p288, %s21, 0
      %s290 = smul.addr %s289, 10
      %s291 = smul.addr %s287, 10
      %s292 = sadd.s32 %s290, %s291
      %s293 = smul.addr %s292, 8
      %s294 = scalar_lea.vmem %s5, %s293
      %vm296 = vcmask 60416
      %297 = vst.msk [vmem:[#allocation2] sm:$0xf] %vm296, 0
      %298 = vst.msk [vmem:[#allocation2 + $0x38] sm:$0xf] %vm296, 0
      %299 = vst.msk [vmem:[#allocation2 + $0x70] sm:$0xf] %vm296, 0
      %300 = vst.msk [vmem:[#allocation2 + $0xa8] sm:$0xf] %vm296, 0
      %vm301 = vcmask 60418
      %302 = vst.msk [vmem:[#allocation2 + $0x34] sm:$0xc] %vm301, 0
      %303 = vst.msk [vmem:[#allocation2 + $0x6c] sm:$0xc] %vm301, 0
      %304 = vst.msk [vmem:[#allocation2 + $0xa4] sm:$0xc] %vm301, 0
      %305 = vst.msk [vmem:[#allocation2 + $0xdc] sm:$0xc] %vm301, 0
      %v306 = vld [vmem:[%s276] sm:$0xf]
      %v307 = vld [vmem:[%s276 + $0x4] sm:$0xf]
      %v308 = vld [vmem:[%s276 + $0x8] sm:$0xf]
      %v309 = vld [vmem:[%s276 + $0xc] sm:$0xf]
      %v310 = vld [vmem:[%s276 + $0x10] sm:$0xf]
      %v311 = vld [vmem:[%s276 + $0x14] sm:$0xf]
      %v312 = vld [vmem:[%s276 + $0x18] sm:$0xf]
      %v313 = vld [vmem:[%s276 + $0x1c] sm:$0xf]
      %v314 = vld [vmem:[%s276 + $0x20] sm:$0xf]
      %v315 = vld [vmem:[%s276 + $0x24] sm:$0xf]
      %v316 = vld [vmem:[%s276 + $0x28] sm:$0xf]
      %v317 = vld [vmem:[%s276 + $0x2c] sm:$0xf]
      %v318 = vld [vmem:[%s276 + $0x30] sm:$0x3]
      %v319 = vld [vmem:[%s2] sm:$0xf]
      %v320 = vld [vmem:[%s2 + $0x4] sm:$0x1]
      %v334 = vunpack.c.l.b16 %v306
      %v335 = vunpack.c.l.b16 %v307
      %v336 = vunpack.c.l.b16 %v308
      %v337 = vunpack.c.l.b16 %v309
      %v338 = vunpack.c.l.b16 %v310
      %v339 = vunpack.c.l.b16 %v311
      %v340 = vunpack.c.l.b16 %v312
      %v341 = vunpack.c.l.b16 %v313
      %v342 = vunpack.c.l.b16 %v314
      %v343 = vunpack.c.l.b16 %v315
      %v344 = vunpack.c.l.b16 %v316
      %v345 = vunpack.c.l.b16 %v317
      %v346 = vunpack.c.l.b16 %v318
      %v347 = vpack.c.b16 %v335, %v334
      %v348 = vpack.c.b16 %v337, %v336
      %v349 = vpack.c.b16 %v339, %v338
      %v350 = vpack.c.b16 %v341, %v340
      %v351 = vpack.c.b16 %v343, %v342
      %v352 = vpack.c.b16 %v345, %v344
      %v353 = vpack.c.b16 %v346, %v346
      %v356 = vunpack.c.l.b16 %v319
      %v357 = vunpack.c.l.b16 %v320
      %v358 = vpack.c.b16 %v357, %v356
      %vm359 = vcmask 72704
      %v361 = vsel %vm359, %v347, 0
      %v364 = vsel %vm359, %v348, 0
      %v367 = vsel %vm359, %v349, 0
      %v370 = vsel %vm359, %v350, 0
      %v373 = vsel %vm359, %v351, 0
      %v376 = vsel %vm359, %v352, 0
      %v379 = vsel %vm359, %v353, 0
      %vm381 = vcmask 1043456
      %vm382 = vcmask 1044480
      %v383 = vsel %vm381, 4294967295, 65535
      %v384 = vsel %vm382, %v383, 0
      %v386 = vand.u32 %v358, %v384
      %388 = vmatpush.bf16.msra.mxu0 0
      %389 = vmatpush.bf16.msra.mxu0 0
      %390 = vmatpush.bf16.msra.mxu0 0
      %391 = vmatpush.bf16.msra.mxu0 0
      %392 = vmatpush.bf16.msra.mxu0 0
      %393 = vmatpush.bf16.msra.mxu0 0
      %394 = vmatpush.bf16.msra.mxu0 0
      %395 = vmatpush.bf16.msra.mxu0 %v386
      %396 = vmatmul.bf16.gmra.mxu0 %v361
      %v397 = vpop.f32.mrf.mxu0
      %v398 = vadd.f32 0.0, %v397
      %v399 = vpop.f32.mrf.mxu0
      %v400 = vadd.f32 0.0, %v399
      %401 = vmatmul.bf16.gmra.mxu0 %v364
      %v402 = vpop.f32.mrf.mxu0
      %v403 = vadd.f32 0.0, %v402
      %v404 = vpop.f32.mrf.mxu0
      %v405 = vadd.f32 0.0, %v404
      %406 = vmatmul.bf16.gmra.mxu0 %v367
      %v407 = vpop.f32.mrf.mxu0
      %v408 = vadd.f32 0.0, %v407
      %v409 = vpop.f32.mrf.mxu0
      %v410 = vadd.f32 0.0, %v409
      %411 = vmatmul.bf16.gmra.mxu0 %v370
      %v412 = vpop.f32.mrf.mxu0
      %v413 = vadd.f32 0.0, %v412
      %v414 = vpop.f32.mrf.mxu0
      %v415 = vadd.f32 0.0, %v414
      %416 = vmatmul.bf16.gmra.mxu0 %v373
      %v417 = vpop.f32.mrf.mxu0
      %v418 = vadd.f32 0.0, %v417
      %v419 = vpop.f32.mrf.mxu0
      %v420 = vadd.f32 0.0, %v419
      %421 = vmatmul.bf16.gmra.mxu0 %v376
      %v422 = vpop.f32.mrf.mxu0
      %v423 = vadd.f32 0.0, %v422
      %v424 = vpop.f32.mrf.mxu0
      %v425 = vadd.f32 0.0, %v424
      %426 = vmatmul.bf16.gmra.mxu0 %v379
      %v427 = vpop.f32.mrf.mxu0
      %v428 = vadd.f32 0.0, %v427
      %v429 = vpop.f32.mrf.mxu0
      %430 = vdwg.mxu0
      %v431 = vpack.c.bf16 %v398, %v398
      %v432 = vpack.c.bf16 %v400, %v400
      %v433 = vpack.c.bf16 %v403, %v403
      %v434 = vpack.c.bf16 %v405, %v405
      %v435 = vpack.c.bf16 %v408, %v408
      %v436 = vpack.c.bf16 %v410, %v410
      %v437 = vpack.c.bf16 %v413, %v413
      %v438 = vpack.c.bf16 %v415, %v415
      %v439 = vpack.c.bf16 %v418, %v418
      %v440 = vpack.c.bf16 %v420, %v420
      %v441 = vpack.c.bf16 %v423, %v423
      %v442 = vpack.c.bf16 %v425, %v425
      %v443 = vpack.c.bf16 %v428, %v428
      %vm444 = vcmask 27648
      %445 = vst.msk [vmem:[#allocation2 + $0x4] sm:$0xf] %vm444, %v431
      %446 = vst.msk [vmem:[#allocation2 + $0x8] sm:$0xf] %vm444, %v432
      %447 = vst.msk [vmem:[#allocation2 + $0xc] sm:$0xf] %vm444, %v433
      %448 = vst.msk [vmem:[#allocation2 + $0x10] sm:$0xf] %vm444, %v434
      %449 = vst.msk [vmem:[#allocation2 + $0x14] sm:$0xf] %vm444, %v435
      %450 = vst.msk [vmem:[#allocation2 + $0x18] sm:$0xf] %vm444, %v436
      %451 = vst.msk [vmem:[#allocation2 + $0x1c] sm:$0xf] %vm444, %v437
      %452 = vst.msk [vmem:[#allocation2 + $0x20] sm:$0xf] %vm444, %v438
      %453 = vst.msk [vmem:[#allocation2 + $0x24] sm:$0xf] %vm444, %v439
      %454 = vst.msk [vmem:[#allocation2 + $0x28] sm:$0xf] %vm444, %v440
      %455 = vst.msk [vmem:[#allocation2 + $0x2c] sm:$0xf] %vm444, %v441
      %456 = vst.msk [vmem:[#allocation2 + $0x30] sm:$0xf] %vm444, %v442
      %vm457 = vcmask 25600
      %458 = vst.msk [vmem:[#allocation2 + $0x34] sm:$0x3] %vm457, %v443
      %472 = vrot.lane.b32.xlu0 %v431, 124
      %v473 = vpop.permute.xlu0 %472
      %474 = vrot.lane.b32.xlu0 %v432, 124
      %v475 = vpop.permute.xlu0 %474
      %476 = vrot.lane.b32.xlu0 %v433, 124
      %v477 = vpop.permute.xlu0 %476
      %478 = vrot.lane.b32.xlu0 %v434, 124
      %v479 = vpop.permute.xlu0 %478
      %480 = vrot.lane.b32.xlu0 %v435, 124
      %v481 = vpop.permute.xlu0 %480
      %482 = vrot.lane.b32.xlu0 %v436, 124
      %v483 = vpop.permute.xlu0 %482
      %484 = vrot.lane.b32.xlu0 %v437, 124
      %v485 = vpop.permute.xlu0 %484
      %486 = vrot.lane.b32.xlu0 %v438, 124
      %v487 = vpop.permute.xlu0 %486
      %488 = vrot.lane.b32.xlu0 %v439, 124
      %v489 = vpop.permute.xlu0 %488
      %490 = vrot.lane.b32.xlu0 %v440, 124
      %v491 = vpop.permute.xlu0 %490
      %492 = vrot.lane.b32.xlu0 %v441, 124
      %v493 = vpop.permute.xlu0 %492
      %494 = vrot.lane.b32.xlu0 %v442, 124
      %v495 = vpop.permute.xlu0 %494
      %496 = vrot.lane.b32.xlu0 %v443, 124
      %v497 = vpop.permute.xlu0 %496
      %s511 = scalar_lea.vmem [#allocation2], 56
      %512 = vst.msk [vmem:[%s511 + $0x4] sm:$0xf] %vm444, %v473
      %513 = vst.msk [vmem:[%s511 + $0x8] sm:$0xf] %vm444, %v475
      %514 = vst.msk [vmem:[%s511 + $0xc] sm:$0xf] %vm444, %v477
      %515 = vst.msk [vmem:[%s511 + $0x10] sm:$0xf] %vm444, %v479
      %516 = vst.msk [vmem:[%s511 + $0x14] sm:$0xf] %vm444, %v481
      %517 = vst.msk [vmem:[%s511 + $0x18] sm:$0xf] %vm444, %v483
      %518 = vst.msk [vmem:[%s511 + $0x1c] sm:$0xf] %vm444, %v485
      %519 = vst.msk [vmem:[%s511 + $0x20] sm:$0xf] %vm444, %v487
      %520 = vst.msk [vmem:[%s511 + $0x24] sm:$0xf] %vm444, %v489
      %521 = vst.msk [vmem:[%s511 + $0x28] sm:$0xf] %vm444, %v491
      %522 = vst.msk [vmem:[%s511 + $0x2c] sm:$0xf] %vm444, %v493
      %523 = vst.msk [vmem:[%s511 + $0x30] sm:$0xf] %vm444, %v495
      %524 = vst.msk [vmem:[%s511 + $0x34] sm:$0x3] %vm457, %v497
      %525 = vrot.lane.b32.xlu0 %v431, 120
      %v526 = vpop.permute.xlu0 %525
      %527 = vrot.lane.b32.xlu0 %v432, 120
      %v528 = vpop.permute.xlu0 %527
      %529 = vrot.lane.b32.xlu0 %v433, 120
      %v530 = vpop.permute.xlu0 %529
      %531 = vrot.lane.b32.xlu0 %v434, 120
      %v532 = vpop.permute.xlu0 %531
      %533 = vrot.lane.b32.xlu0 %v435, 120
      %v534 = vpop.permute.xlu0 %533
      %535 = vrot.lane.b32.xlu0 %v436, 120
      %v536 = vpop.permute.xlu0 %535
      %537 = vrot.lane.b32.xlu0 %v437, 120
      %v538 = vpop.permute.xlu0 %537
      %539 = vrot.lane.b32.xlu0 %v438, 120
      %v540 = vpop.permute.xlu0 %539
      %541 = vrot.lane.b32.xlu0 %v439, 120
      %v542 = vpop.permute.xlu0 %541
      %543 = vrot.lane.b32.xlu0 %v440, 120
      %v544 = vpop.permute.xlu0 %543
      %545 = vrot.lane.b32.xlu0 %v441, 120
      %v546 = vpop.permute.xlu0 %545
      %547 = vrot.lane.b32.xlu0 %v442, 120
      %v548 = vpop.permute.xlu0 %547
      %549 = vrot.lane.b32.xlu0 %v443, 120
      %v550 = vpop.permute.xlu0 %549
      %s564 = scalar_lea.vmem [#allocation2], 112
      %565 = vst.msk [vmem:[%s564 + $0x4] sm:$0xf] %vm444, %v526
      %566 = vst.msk [vmem:[%s564 + $0x8] sm:$0xf] %vm444, %v528
      %567 = vst.msk [vmem:[%s564 + $0xc] sm:$0xf] %vm444, %v530
      %568 = vst.msk [vmem:[%s564 + $0x10] sm:$0xf] %vm444, %v532
      %569 = vst.msk [vmem:[%s564 + $0x14] sm:$0xf] %vm444, %v534
      %570 = vst.msk [vmem:[%s564 + $0x18] sm:$0xf] %vm444, %v536
      %571 = vst.msk [vmem:[%s564 + $0x1c] sm:$0xf] %vm444, %v538
      %572 = vst.msk [vmem:[%s564 + $0x20] sm:$0xf] %vm444, %v540
      %573 = vst.msk [vmem:[%s564 + $0x24] sm:$0xf] %vm444, %v542
      %574 = vst.msk [vmem:[%s564 + $0x28] sm:$0xf] %vm444, %v544
      %575 = vst.msk [vmem:[%s564 + $0x2c] sm:$0xf] %vm444, %v546
      %576 = vst.msk [vmem:[%s564 + $0x30] sm:$0xf] %vm444, %v548
      %577 = vst.msk [vmem:[%s564 + $0x34] sm:$0x3] %vm457, %v550
      %578 = vrot.lane.b32.xlu0 %v431, 116
      %v579 = vpop.permute.xlu0 %578
      %580 = vrot.lane.b32.xlu0 %v432, 116
      %v581 = vpop.permute.xlu0 %580
      %582 = vrot.lane.b32.xlu0 %v433, 116
      %v583 = vpop.permute.xlu0 %582
      %584 = vrot.lane.b32.xlu0 %v434, 116
      %v585 = vpop.permute.xlu0 %584
      %586 = vrot.lane.b32.xlu0 %v435, 116
      %v587 = vpop.permute.xlu0 %586
      %588 = vrot.lane.b32.xlu0 %v436, 116
      %v589 = vpop.permute.xlu0 %588
      %590 = vrot.lane.b32.xlu0 %v437, 116
      %v591 = vpop.permute.xlu0 %590
      %592 = vrot.lane.b32.xlu0 %v438, 116
      %v593 = vpop.permute.xlu0 %592
      %594 = vrot.lane.b32.xlu0 %v439, 116
      %v595 = vpop.permute.xlu0 %594
      %596 = vrot.lane.b32.xlu0 %v440, 116
      %v597 = vpop.permute.xlu0 %596
      %598 = vrot.lane.b32.xlu0 %v441, 116
      %v599 = vpop.permute.xlu0 %598
      %600 = vrot.lane.b32.xlu0 %v442, 116
      %v601 = vpop.permute.xlu0 %600
      %602 = vrot.lane.b32.xlu0 %v443, 116
      %v603 = vpop.permute.xlu0 %602
      %s617 = scalar_lea.vmem [#allocation2], 168
      %618 = vst.msk [vmem:[%s617 + $0x4] sm:$0xf] %vm444, %v579
      %619 = vst.msk [vmem:[%s617 + $0x8] sm:$0xf] %vm444, %v581
      %620 = vst.msk [vmem:[%s617 + $0xc] sm:$0xf] %vm444, %v583
      %621 = vst.msk [vmem:[%s617 + $0x10] sm:$0xf] %vm444, %v585
      %622 = vst.msk [vmem:[%s617 + $0x14] sm:$0xf] %vm444, %v587
      %623 = vst.msk [vmem:[%s617 + $0x18] sm:$0xf] %vm444, %v589
      %624 = vst.msk [vmem:[%s617 + $0x1c] sm:$0xf] %vm444, %v591
      %625 = vst.msk [vmem:[%s617 + $0x20] sm:$0xf] %vm444, %v593
      %626 = vst.msk [vmem:[%s617 + $0x24] sm:$0xf] %vm444, %v595
      %627 = vst.msk [vmem:[%s617 + $0x28] sm:$0xf] %vm444, %v597
      %628 = vst.msk [vmem:[%s617 + $0x2c] sm:$0xf] %vm444, %v599
      %629 = vst.msk [vmem:[%s617 + $0x30] sm:$0xf] %vm444, %v601
      %630 = vst.msk [vmem:[%s617 + $0x34] sm:$0x3] %vm457, %v603
      %v631 = vld [vmem:[%s285] sm:$0xf]
      %v632 = vld [vmem:[%s285 + $0x4] sm:$0xf]
      %v633 = vld [vmem:[%s285 + $0x8] sm:$0xf]
      %v634 = vld [vmem:[%s285 + $0xc] sm:$0xf]
      %v635 = vld [vmem:[%s285 + $0x10] sm:$0xf]
      %v636 = vld [vmem:[%s285 + $0x14] sm:$0xf]
      %v637 = vld [vmem:[%s285 + $0x18] sm:$0xf]
      %v638 = vld [vmem:[%s285 + $0x1c] sm:$0xf]
      %v639 = vld [vmem:[%s285 + $0x20] sm:$0xf]
      %v640 = vld [vmem:[%s285 + $0x24] sm:$0xf]
      %v641 = vld [vmem:[%s285 + $0x28] sm:$0xf]
      %v642 = vld [vmem:[%s285 + $0x2c] sm:$0xf]
      %v643 = vld [vmem:[%s285 + $0x30] sm:$0x3]
      %v644 = vld [vmem:[%s285 + $0x34] sm:$0xf]
      %v645 = vld [vmem:[%s285 + $0x38] sm:$0xf]
      %v646 = vld [vmem:[%s285 + $0x3c] sm:$0xf]
      %v647 = vld [vmem:[%s285 + $0x40] sm:$0xf]
      %v648 = vld [vmem:[%s285 + $0x44] sm:$0xf]
      %v649 = vld [vmem:[%s285 + $0x48] sm:$0xf]
      %v650 = vld [vmem:[%s285 + $0x4c] sm:$0xf]
      %v651 = vld [vmem:[%s285 + $0x50] sm:$0xf]
      %v652 = vld [vmem:[%s285 + $0x54] sm:$0xf]
      %v653 = vld [vmem:[%s285 + $0x58] sm:$0xf]
      %v654 = vld [vmem:[%s285 + $0x5c] sm:$0xf]
      %v655 = vld [vmem:[%s285 + $0x60] sm:$0xf]
      %v656 = vld [vmem:[%s285 + $0x64] sm:$0x3]
      %v657 = vld [vmem:[%s285 + $0x68] sm:$0xf]
      %v658 = vld [vmem:[%s285 + $0x6c] sm:$0xf]
      %v659 = vld [vmem:[%s285 + $0x70] sm:$0xf]
      %v660 = vld [vmem:[%s285 + $0x74] sm:$0xf]
      %v661 = vld [vmem:[%s285 + $0x78] sm:$0xf]
      %v662 = vld [vmem:[%s285 + $0x7c] sm:$0xf]
      %v663 = vld [vmem:[%s285 + $0x80] sm:$0xf]
      %v664 = vld [vmem:[%s285 + $0x84] sm:$0xf]
      %v665 = vld [vmem:[%s285 + $0x88] sm:$0xf]
      %v666 = vld [vmem:[%s285 + $0x8c] sm:$0xf]
      %v667 = vld [vmem:[%s285 + $0x90] sm:$0xf]
      %v668 = vld [vmem:[%s285 + $0x94] sm:$0xf]
      %v669 = vld [vmem:[%s285 + $0x98] sm:$0x3]
      %v670 = vld [vmem:[%s285 + $0x9c] sm:$0xf]
      %v671 = vld [vmem:[%s285 + $0xa0] sm:$0xf]
      %v672 = vld [vmem:[%s285 + $0xa4] sm:$0xf]
      %v673 = vld [vmem:[%s285 + $0xa8] sm:$0xf]
      %v674 = vld [vmem:[%s285 + $0xac] sm:$0xf]
      %v675 = vld [vmem:[%s285 + $0xb0] sm:$0xf]
      %v676 = vld [vmem:[%s285 + $0xb4] sm:$0xf]
      %v677 = vld [vmem:[%s285 + $0xb8] sm:$0xf]
      %v678 = vld [vmem:[%s285 + $0xbc] sm:$0xf]
      %v679 = vld [vmem:[%s285 + $0xc0] sm:$0xf]
      %v680 = vld [vmem:[%s285 + $0xc4] sm:$0xf]
      %v681 = vld [vmem:[%s285 + $0xc8] sm:$0xf]
      %v682 = vld [vmem:[%s285 + $0xcc] sm:$0x3]
      %735 = vrot.lane.b32.xlu0 %v631, 4
      %v736 = vpop.permute.xlu0 %735
      %737 = vrot.lane.b32.xlu0 %v632, 4
      %v738 = vpop.permute.xlu0 %737
      %739 = vrot.lane.b32.xlu0 %v633, 4
      %v740 = vpop.permute.xlu0 %739
      %741 = vrot.lane.b32.xlu0 %v634, 4
      %v742 = vpop.permute.xlu0 %741
      %743 = vrot.lane.b32.xlu0 %v635, 4
      %v744 = vpop.permute.xlu0 %743
      %745 = vrot.lane.b32.xlu0 %v636, 4
      %v746 = vpop.permute.xlu0 %745
      %747 = vrot.lane.b32.xlu0 %v637, 4
      %v748 = vpop.permute.xlu0 %747
      %749 = vrot.lane.b32.xlu0 %v638, 4
      %v750 = vpop.permute.xlu0 %749
      %751 = vrot.lane.b32.xlu0 %v639, 4
      %v752 = vpop.permute.xlu0 %751
      %753 = vrot.lane.b32.xlu0 %v640, 4
      %v754 = vpop.permute.xlu0 %753
      %755 = vrot.lane.b32.xlu0 %v641, 4
      %v756 = vpop.permute.xlu0 %755
      %757 = vrot.lane.b32.xlu0 %v642, 4
      %v758 = vpop.permute.xlu0 %757
      %759 = vrot.lane.b32.xlu0 %v643, 4
      %v760 = vpop.permute.xlu0 %759
      %761 = vrot.lane.b32.xlu0 %v644, 4
      %v762 = vpop.permute.xlu0 %761
      %763 = vrot.lane.b32.xlu0 %v645, 4
      %v764 = vpop.permute.xlu0 %763
      %765 = vrot.lane.b32.xlu0 %v646, 4
      %v766 = vpop.permute.xlu0 %765
      %767 = vrot.lane.b32.xlu0 %v647, 4
      %v768 = vpop.permute.xlu0 %767
      %769 = vrot.lane.b32.xlu0 %v648, 4
      %v770 = vpop.permute.xlu0 %769
      %771 = vrot.lane.b32.xlu0 %v649, 4
      %v772 = vpop.permute.xlu0 %771
      %773 = vrot.lane.b32.xlu0 %v650, 4
      %v774 = vpop.permute.xlu0 %773
      %775 = vrot.lane.b32.xlu0 %v651, 4
      %v776 = vpop.permute.xlu0 %775
      %777 = vrot.lane.b32.xlu0 %v652, 4
      %v778 = vpop.permute.xlu0 %777
      %779 = vrot.lane.b32.xlu0 %v653, 4
      %v780 = vpop.permute.xlu0 %779
      %781 = vrot.lane.b32.xlu0 %v654, 4
      %v782 = vpop.permute.xlu0 %781
      %783 = vrot.lane.b32.xlu0 %v655, 4
      %v784 = vpop.permute.xlu0 %783
      %785 = vrot.lane.b32.xlu0 %v656, 4
      %v786 = vpop.permute.xlu0 %785
      %787 = vrot.lane.b32.xlu0 %v657, 4
      %v788 = vpop.permute.xlu0 %787
      %789 = vrot.lane.b32.xlu0 %v658, 4
      %v790 = vpop.permute.xlu0 %789
      %791 = vrot.lane.b32.xlu0 %v659, 4
      %v792 = vpop.permute.xlu0 %791
      %793 = vrot.lane.b32.xlu0 %v660, 4
      %v794 = vpop.permute.xlu0 %793
      %795 = vrot.lane.b32.xlu0 %v661, 4
      %v796 = vpop.permute.xlu0 %795
      %797 = vrot.lane.b32.xlu0 %v662, 4
      %v798 = vpop.permute.xlu0 %797
      %799 = vrot.lane.b32.xlu0 %v663, 4
      %v800 = vpop.permute.xlu0 %799
      %801 = vrot.lane.b32.xlu0 %v664, 4
      %v802 = vpop.permute.xlu0 %801
      %803 = vrot.lane.b32.xlu0 %v665, 4
      %v804 = vpop.permute.xlu0 %803
      %805 = vrot.lane.b32.xlu0 %v666, 4
      %v806 = vpop.permute.xlu0 %805
      %807 = vrot.lane.b32.xlu0 %v667, 4
      %v808 = vpop.permute.xlu0 %807
      %809 = vrot.lane.b32.xlu0 %v668, 4
      %v810 = vpop.permute.xlu0 %809
      %811 = vrot.lane.b32.xlu0 %v669, 4
      %v812 = vpop.permute.xlu0 %811
      %813 = vrot.lane.b32.xlu0 %v670, 4
      %v814 = vpop.permute.xlu0 %813
      %815 = vrot.lane.b32.xlu0 %v671, 4
      %v816 = vpop.permute.xlu0 %815
      %817 = vrot.lane.b32.xlu0 %v672, 4
      %v818 = vpop.permute.xlu0 %817
      %819 = vrot.lane.b32.xlu0 %v673, 4
      %v820 = vpop.permute.xlu0 %819
      %821 = vrot.lane.b32.xlu0 %v674, 4
      %v822 = vpop.permute.xlu0 %821
      %823 = vrot.lane.b32.xlu0 %v675, 4
      %v824 = vpop.permute.xlu0 %823
      %825 = vrot.lane.b32.xlu0 %v676, 4
      %v826 = vpop.permute.xlu0 %825
      %827 = vrot.lane.b32.xlu0 %v677, 4
      %v828 = vpop.permute.xlu0 %827
      %829 = vrot.lane.b32.xlu0 %v678, 4
      %v830 = vpop.permute.xlu0 %829
      %831 = vrot.lane.b32.xlu0 %v679, 4
      %v832 = vpop.permute.xlu0 %831
      %833 = vrot.lane.b32.xlu0 %v680, 4
      %v834 = vpop.permute.xlu0 %833
      %835 = vrot.lane.b32.xlu0 %v681, 4
      %v836 = vpop.permute.xlu0 %835
      %837 = vrot.lane.b32.xlu0 %v682, 4
      %v838 = vpop.permute.xlu0 %837
      %vm891 = vcmask 60448
      %892 = vst.msk [vmem:[#allocation2 + $0x4] sm:$0xf] %vm891, %v736
      %893 = vst.msk [vmem:[#allocation2 + $0x8] sm:$0xf] %vm891, %v738
      %894 = vst.msk [vmem:[#allocation2 + $0xc] sm:$0xf] %vm891, %v740
      %895 = vst.msk [vmem:[#allocation2 + $0x10] sm:$0xf] %vm891, %v742
      %896 = vst.msk [vmem:[#allocation2 + $0x14] sm:$0xf] %vm891, %v744
      %897 = vst.msk [vmem:[#allocation2 + $0x18] sm:$0xf] %vm891, %v746
      %898 = vst.msk [vmem:[#allocation2 + $0x1c] sm:$0xf] %vm891, %v748
      %899 = vst.msk [vmem:[#allocation2 + $0x20] sm:$0xf] %vm891, %v750
      %900 = vst.msk [vmem:[#allocation2 + $0x24] sm:$0xf] %vm891, %v752
      %901 = vst.msk [vmem:[#allocation2 + $0x28] sm:$0xf] %vm891, %v754
      %902 = vst.msk [vmem:[#allocation2 + $0x2c] sm:$0xf] %vm891, %v756
      %903 = vst.msk [vmem:[#allocation2 + $0x30] sm:$0xf] %vm891, %v758
      %vm904 = vcmask 58400
      %905 = vst.msk [vmem:[#allocation2 + $0x34] sm:$0x3] %vm904, %v760
      %906 = vst.msk [vmem:[#allocation2 + $0x3c] sm:$0xf] %vm891, %v762
      %907 = vst.msk [vmem:[#allocation2 + $0x40] sm:$0xf] %vm891, %v764
      %908 = vst.msk [vmem:[#allocation2 + $0x44] sm:$0xf] %vm891, %v766
      %909 = vst.msk [vmem:[#allocation2 + $0x48] sm:$0xf] %vm891, %v768
      %910 = vst.msk [vmem:[#allocation2 + $0x4c] sm:$0xf] %vm891, %v770
      %911 = vst.msk [vmem:[#allocation2 + $0x50] sm:$0xf] %vm891, %v772
      %912 = vst.msk [vmem:[#allocation2 + $0x54] sm:$0xf] %vm891, %v774
      %913 = vst.msk [vmem:[#allocation2 + $0x58] sm:$0xf] %vm891, %v776
      %914 = vst.msk [vmem:[#allocation2 + $0x5c] sm:$0xf] %vm891, %v778
      %915 = vst.msk [vmem:[#allocation2 + $0x60] sm:$0xf] %vm891, %v780
      %916 = vst.msk [vmem:[#allocation2 + $0x64] sm:$0xf] %vm891, %v782
      %917 = vst.msk [vmem:[#allocation2 + $0x68] sm:$0xf] %vm891, %v784
      %918 = vst.msk [vmem:[#allocation2 + $0x6c] sm:$0x3] %vm904, %v786
      %919 = vst.msk [vmem:[#allocation2 + $0x74] sm:$0xf] %vm891, %v788
      %920 = vst.msk [vmem:[#allocation2 + $0x78] sm:$0xf] %vm891, %v790
      %921 = vst.msk [vmem:[#allocation2 + $0x7c] sm:$0xf] %vm891, %v792
      %922 = vst.msk [vmem:[#allocation2 + $0x80] sm:$0xf] %vm891, %v794
      %923 = vst.msk [vmem:[#allocation2 + $0x84] sm:$0xf] %vm891, %v796
      %924 = vst.msk [vmem:[#allocation2 + $0x88] sm:$0xf] %vm891, %v798
      %925 = vst.msk [vmem:[#allocation2 + $0x8c] sm:$0xf] %vm891, %v800
      %926 = vst.msk [vmem:[#allocation2 + $0x90] sm:$0xf] %vm891, %v802
      %927 = vst.msk [vmem:[#allocation2 + $0x94] sm:$0xf] %vm891, %v804
      %928 = vst.msk [vmem:[#allocation2 + $0x98] sm:$0xf] %vm891, %v806
      %929 = vst.msk [vmem:[#allocation2 + $0x9c] sm:$0xf] %vm891, %v808
      %930 = vst.msk [vmem:[#allocation2 + $0xa0] sm:$0xf] %vm891, %v810
      %931 = vst.msk [vmem:[#allocation2 + $0xa4] sm:$0x3] %vm904, %v812
      %932 = vst.msk [vmem:[#allocation2 + $0xac] sm:$0xf] %vm891, %v814
      %933 = vst.msk [vmem:[#allocation2 + $0xb0] sm:$0xf] %vm891, %v816
      %934 = vst.msk [vmem:[#allocation2 + $0xb4] sm:$0xf] %vm891, %v818
      %935 = vst.msk [vmem:[#allocation2 + $0xb8] sm:$0xf] %vm891, %v820
      %936 = vst.msk [vmem:[#allocation2 + $0xbc] sm:$0xf] %vm891, %v822
      %937 = vst.msk [vmem:[#allocation2 + $0xc0] sm:$0xf] %vm891, %v824
      %938 = vst.msk [vmem:[#allocation2 + $0xc4] sm:$0xf] %vm891, %v826
      %939 = vst.msk [vmem:[#allocation2 + $0xc8] sm:$0xf] %vm891, %v828
      %940 = vst.msk [vmem:[#allocation2 + $0xcc] sm:$0xf] %vm891, %v830
      %941 = vst.msk [vmem:[#allocation2 + $0xd0] sm:$0xf] %vm891, %v832
      %942 = vst.msk [vmem:[#allocation2 + $0xd4] sm:$0xf] %vm891, %v834
      %943 = vst.msk [vmem:[#allocation2 + $0xd8] sm:$0xf] %vm891, %v836
      %944 = vst.msk [vmem:[#allocation2 + $0xdc] sm:$0x3] %vm904, %v838
      %v945 = vld [vmem:[%s617] sm:$0x8]
      %v946 = vld [vmem:[%s617 + $0x4] sm:$0xf]
      %v947 = vld [vmem:[%s617 + $0x8] sm:$0xf]
      %v948 = vld [vmem:[%s617 + $0xc] sm:$0xf]
      %v949 = vld [vmem:[%s617 + $0x10] sm:$0xf]
      %v950 = vld [vmem:[%s617 + $0x14] sm:$0xf]
      %v951 = vld [vmem:[%s617 + $0x18] sm:$0xf]
      %v952 = vld [vmem:[%s617 + $0x1c] sm:$0xf]
      %v953 = vld [vmem:[%s617 + $0x20] sm:$0xf]
      %v954 = vld [vmem:[%s617 + $0x24] sm:$0xf]
      %v955 = vld [vmem:[%s617 + $0x28] sm:$0xf]
      %v956 = vld [vmem:[%s3] sm:$0xf]
      %v957 = vld [vmem:[%s564 + $0x4] sm:$0xf]
      %v958 = vld [vmem:[%s564 + $0x8] sm:$0xf]
      %v959 = vld [vmem:[%s564 + $0xc] sm:$0xf]
      %v960 = vld [vmem:[%s564 + $0x10] sm:$0xf]
      %v961 = vld [vmem:[%s564 + $0x14] sm:$0xf]
      %v962 = vld [vmem:[%s564 + $0x18] sm:$0xf]
      %v963 = vld [vmem:[%s564 + $0x1c] sm:$0xf]
      %v964 = vld [vmem:[%s564 + $0x20] sm:$0xf]
      %v965 = vld [vmem:[%s564 + $0x24] sm:$0xf]
      %v966 = vld [vmem:[%s564 + $0x28] sm:$0xf]
      %s967 = scalar_lea.vmem %s3, 4
      %v968 = vld [vmem:[%s967] sm:$0xf]
      %v979 = vunpack.c.l.b16 %v957
      %v980 = vunpack.c.l.b16 %v958
      %v981 = vunpack.c.l.b16 %v959
      %v982 = vunpack.c.l.b16 %v960
      %v983 = vunpack.c.l.b16 %v961
      %v984 = vunpack.c.l.b16 %v962
      %v985 = vunpack.c.l.b16 %v963
      %v986 = vunpack.c.l.b16 %v964
      %v987 = vunpack.c.l.b16 %v965
      %v988 = vunpack.c.l.b16 %v966
      %v989 = vpack.c.b16 %v980, %v979
      %v990 = vpack.c.b16 %v982, %v981
      %v991 = vpack.c.b16 %v984, %v983
      %v992 = vpack.c.b16 %v986, %v985
      %v993 = vpack.c.b16 %v988, %v987
      %vm994 = vcmask 64512
      %v996 = vsel %vm994, %v989, 0
      %v999 = vsel %vm994, %v990, 0
      %v1002 = vsel %vm994, %v991, 0
      %v1005 = vsel %vm994, %v992, 0
      %v1008 = vsel %vm994, %v993, 0
      %v1011 = vsel %vm381, %v968, 0
      %1013 = vmatpush.bf16.msra.mxu0 0
      %1014 = vmatpush.bf16.msra.mxu0 0
      %1015 = vmatpush.bf16.msra.mxu0 0
      %1016 = vmatpush.bf16.msra.mxu0 0
      %1017 = vmatpush.bf16.msra.mxu0 0
      %1018 = vmatpush.bf16.msra.mxu0 0
      %1019 = vmatpush.bf16.msra.mxu0 0
      %1020 = vmatpush.bf16.msra.mxu0 %v1011
      %1021 = vmatmul.bf16.gmra.mxu0 %v996
      %v1022 = vpop.f32.mrf.mxu0
      %v1023 = vadd.f32 0.0, %v1022
      %v1024 = vpop.f32.mrf.mxu0
      %v1025 = vadd.f32 0.0, %v1024
      %1026 = vmatmul.bf16.gmra.mxu0 %v999
      %v1027 = vpop.f32.mrf.mxu0
      %v1028 = vadd.f32 0.0, %v1027
      %v1029 = vpop.f32.mrf.mxu0
      %v1030 = vadd.f32 0.0, %v1029
      %1031 = vmatmul.bf16.gmra.mxu0 %v1002
      %v1032 = vpop.f32.mrf.mxu0
      %v1033 = vadd.f32 0.0, %v1032
      %v1034 = vpop.f32.mrf.mxu0
      %v1035 = vadd.f32 0.0, %v1034
      %1036 = vmatmul.bf16.gmra.mxu0 %v1005
      %v1037 = vpop.f32.mrf.mxu0
      %v1038 = vadd.f32 0.0, %v1037
      %v1039 = vpop.f32.mrf.mxu0
      %v1040 = vadd.f32 0.0, %v1039
      %1041 = vmatmul.bf16.gmra.mxu0 %v1008
      %v1042 = vpop.f32.mrf.mxu0
      %v1043 = vadd.f32 0.0, %v1042
      %v1044 = vpop.f32.mrf.mxu0
      %v1045 = vadd.f32 0.0, %v1044
      %1046 = vdwg.mxu0
      %v1058 = vunpack.c.l.b16 %v945
      %v1059 = vunpack.c.l.b16 %v946
      %v1060 = vunpack.c.l.b16 %v947
      %v1061 = vunpack.c.l.b16 %v948
      %v1062 = vunpack.c.l.b16 %v949
      %v1063 = vunpack.c.l.b16 %v950
      %v1064 = vunpack.c.l.b16 %v951
      %v1065 = vunpack.c.l.b16 %v952
      %v1066 = vunpack.c.l.b16 %v953
      %v1067 = vunpack.c.l.b16 %v954
      %v1068 = vunpack.c.l.b16 %v955
      %v1069 = vpack.c.b16 %v1059, %v1058
      %v1070 = vpack.c.b16 %v1061, %v1060
      %v1071 = vpack.c.b16 %v1063, %v1062
      %v1072 = vpack.c.b16 %v1065, %v1064
      %v1073 = vpack.c.b16 %v1067, %v1066
      %v1074 = vpack.c.b16 %v1068, %v1068
      %vm1075 = vsmask.f32 4352
      %v1077 = vshrl.u32 %v1069, 16
      %v1079 = vrot.slane %v1077, 3
      %v1080 = vshll.u32 %v1069, 16
      %v1082 = vrot.slane %v1080, 4
      %v1083 = vor.u32 %v1079, %v1082
      %v1085 = vshrl.u32 %v1070, 16
      %v1087 = vrot.slane %v1085, 3
      %v1088 = vshll.u32 %v1070, 16
      %v1090 = vrot.slane %v1088, 4
      %v1091 = vor.u32 %v1087, %v1090
      %v1092 = vsel %vm1075, %v1083, %v1091
      %v1094 = vshrl.u32 %v1071, 16
      %v1096 = vrot.slane %v1094, 3
      %v1097 = vshll.u32 %v1071, 16
      %v1099 = vrot.slane %v1097, 4
      %v1100 = vor.u32 %v1096, %v1099
      %v1101 = vsel %vm1075, %v1091, %v1100
      %v1103 = vshrl.u32 %v1072, 16
      %v1105 = vrot.slane %v1103, 3
      %v1106 = vshll.u32 %v1072, 16
      %v1108 = vrot.slane %v1106, 4
      %v1109 = vor.u32 %v1105, %v1108
      %v1110 = vsel %vm1075, %v1100, %v1109
      %v1112 = vshrl.u32 %v1073, 16
      %v1114 = vrot.slane %v1112, 3
      %v1115 = vshll.u32 %v1073, 16
      %v1117 = vrot.slane %v1115, 4
      %v1118 = vor.u32 %v1114, %v1117
      %v1119 = vsel %vm1075, %v1109, %v1118
      %v1121 = vshrl.u32 %v1074, 16
      %v1123 = vrot.slane %v1121, 3
      %v1124 = vshll.u32 %v1074, 16
      %v1126 = vrot.slane %v1124, 4
      %v1127 = vor.u32 %v1123, %v1126
      %v1128 = vsel %vm1075, %v1118, %v1127
      %v1130 = vsel %vm994, %v1092, 0
      %v1133 = vsel %vm994, %v1101, 0
      %v1136 = vsel %vm994, %v1110, 0
      %v1139 = vsel %vm994, %v1119, 0
      %v1142 = vsel %vm994, %v1128, 0
      %v1145 = vsel %vm381, %v956, 0
      %1147 = vmatpush.bf16.msra.mxu0 0
      %1148 = vmatpush.bf16.msra.mxu0 0
      %1149 = vmatpush.bf16.msra.mxu0 0
      %1150 = vmatpush.bf16.msra.mxu0 0
      %1151 = vmatpush.bf16.msra.mxu0 0
      %1152 = vmatpush.bf16.msra.mxu0 0
      %1153 = vmatpush.bf16.msra.mxu0 0
      %1154 = vmatpush.bf16.msra.mxu0 %v1145
      %1155 = vmatmul.bf16.gmra.mxu0 %v1130
      %v1156 = vpop.f32.mrf.mxu0
      %v1157 = vadd.f32 %v1023, %v1156
      %v1158 = vpop.f32.mrf.mxu0
      %v1159 = vadd.f32 %v1025, %v1158
      %1160 = vmatmul.bf16.gmra.mxu0 %v1133
      %v1161 = vpop.f32.mrf.mxu0
      %v1162 = vadd.f32 %v1028, %v1161
      %v1163 = vpop.f32.mrf.mxu0
      %v1164 = vadd.f32 %v1030, %v1163
      %1165 = vmatmul.bf16.gmra.mxu0 %v1136
      %v1166 = vpop.f32.mrf.mxu0
      %v1167 = vadd.f32 %v1033, %v1166
      %v1168 = vpop.f32.mrf.mxu0
      %v1169 = vadd.f32 %v1035, %v1168
      %1170 = vmatmul.bf16.gmra.mxu0 %v1139
      %v1171 = vpop.f32.mrf.mxu0
      %v1172 = vadd.f32 %v1038, %v1171
      %v1173 = vpop.f32.mrf.mxu0
      %v1174 = vadd.f32 %v1040, %v1173
      %1175 = vmatmul.bf16.gmra.mxu0 %v1142
      %v1176 = vpop.f32.mrf.mxu0
      %v1177 = vadd.f32 %v1043, %v1176
      %v1178 = vpop.f32.mrf.mxu0
      %v1179 = vadd.f32 %v1045, %v1178
      %1180 = vdwg.mxu0
      %s1181 = scalar_lea.vmem %s3, 8
      %v1182 = vld [vmem:[%s1181] sm:$0xf]
      %v1183 = vpack.c.b16 %v1060, %v1059
      %v1184 = vpack.c.b16 %v1062, %v1061
      %v1185 = vpack.c.b16 %v1064, %v1063
      %v1186 = vpack.c.b16 %v1066, %v1065
      %v1187 = vpack.c.b16 %v1068, %v1067
      %v1189 = vsel %vm994, %v1183, 0
      %v1192 = vsel %vm994, %v1184, 0
      %v1195 = vsel %vm994, %v1185, 0
      %v1198 = vsel %vm994, %v1186, 0
      %v1201 = vsel %vm994, %v1187, 0
      %v1204 = vsel %vm381, %v1182, 0
      %1206 = vmatpush.bf16.msra.mxu0 0
      %1207 = vmatpush.bf16.msra.mxu0 0
      %1208 = vmatpush.bf16.msra.mxu0 0
      %1209 = vmatpush.bf16.msra.mxu0 0
      %1210 = vmatpush.bf16.msra.mxu0 0
      %1211 = vmatpush.bf16.msra.mxu0 0
      %1212 = vmatpush.bf16.msra.mxu0 0
      %1213 = vmatpush.bf16.msra.mxu0 %v1204
      %1214 = vmatmul.bf16.gmra.mxu0 %v1189
      %v1215 = vpop.f32.mrf.mxu0
      %v1216 = vadd.f32 0.0, %v1215
      %v1217 = vpop.f32.mrf.mxu0
      %v1218 = vadd.f32 0.0, %v1217
      %1219 = vmatmul.bf16.gmra.mxu0 %v1192
      %v1220 = vpop.f32.mrf.mxu0
      %v1221 = vadd.f32 0.0, %v1220
      %v1222 = vpop.f32.mrf.mxu0
      %v1223 = vadd.f32 0.0, %v1222
      %1224 = vmatmul.bf16.gmra.mxu0 %v1195
      %v1225 = vpop.f32.mrf.mxu0
      %v1226 = vadd.f32 0.0, %v1225
      %v1227 = vpop.f32.mrf.mxu0
      %v1228 = vadd.f32 0.0, %v1227
      %1229 = vmatmul.bf16.gmra.mxu0 %v1198
      %v1230 = vpop.f32.mrf.mxu0
      %v1231 = vadd.f32 0.0, %v1230
      %v1232 = vpop.f32.mrf.mxu0
      %v1233 = vadd.f32 0.0, %v1232
      %1234 = vmatmul.bf16.gmra.mxu0 %v1201
      %v1235 = vpop.f32.mrf.mxu0
      %v1236 = vadd.f32 0.0, %v1235
      %v1237 = vpop.f32.mrf.mxu0
      %v1238 = vadd.f32 0.0, %v1237
      %1239 = vdwg.mxu0
      %v1240 = vadd.f32 %v1157, %v1216
      %v1241 = vadd.f32 %v1159, %v1218
      %v1242 = vadd.f32 %v1162, %v1221
      %v1243 = vadd.f32 %v1164, %v1223
      %v1244 = vadd.f32 %v1167, %v1226
      %v1245 = vadd.f32 %v1169, %v1228
      %v1246 = vadd.f32 %v1172, %v1231
      %v1247 = vadd.f32 %v1174, %v1233
      %v1248 = vadd.f32 %v1177, %v1236
      %v1249 = vadd.f32 %v1179, %v1238
      %v1250 = vld [vmem:[%s564 + $0x4] sm:$0xf]
      %v1251 = vld [vmem:[%s564 + $0x8] sm:$0xf]
      %v1252 = vld [vmem:[%s564 + $0xc] sm:$0xf]
      %v1253 = vld [vmem:[%s564 + $0x10] sm:$0xf]
      %v1254 = vld [vmem:[%s564 + $0x14] sm:$0xf]
      %v1255 = vld [vmem:[%s564 + $0x18] sm:$0xf]
      %v1256 = vld [vmem:[%s564 + $0x1c] sm:$0xf]
      %v1257 = vld [vmem:[%s564 + $0x20] sm:$0xf]
      %v1258 = vld [vmem:[%s564 + $0x24] sm:$0xf]
      %v1259 = vld [vmem:[%s564 + $0x28] sm:$0xf]
      %v1260 = vld [vmem:[%s564 + $0x2c] sm:$0x1]
      %s1261 = scalar_lea.vmem %s3, 12
      %v1262 = vld [vmem:[%s1261] sm:$0xf]
      %v1274 = vunpack.c.l.b16 %v1250
      %v1275 = vunpack.c.l.b16 %v1251
      %v1276 = vunpack.c.l.b16 %v1252
      %v1277 = vunpack.c.l.b16 %v1253
      %v1278 = vunpack.c.l.b16 %v1254
      %v1279 = vunpack.c.l.b16 %v1255
      %v1280 = vunpack.c.l.b16 %v1256
      %v1281 = vunpack.c.l.b16 %v1257
      %v1282 = vunpack.c.l.b16 %v1258
      %v1283 = vunpack.c.l.b16 %v1259
      %v1284 = vunpack.c.l.b16 %v1260
      %v1285 = vpack.c.b16 %v1275, %v1274
      %v1286 = vpack.c.b16 %v1277, %v1276
      %v1287 = vpack.c.b16 %v1279, %v1278
      %v1288 = vpack.c.b16 %v1281, %v1280
      %v1289 = vpack.c.b16 %v1283, %v1282
      %v1290 = vpack.c.b16 %v1284, %v1284
      %vm1291 = vsmask.f32 7424
      %v1293 = vshrl.u32 %v1285, 16
      %v1295 = vshll.u32 %v1285, 16
      %v1297 = vrot.slane %v1295, 1
      %v1298 = vor.u32 %v1293, %v1297
      %v1300 = vshll.u32 %v1286, 16
      %v1302 = vrot.slane %v1300, 1
      %v1303 = vsel %vm1291, %v1298, %v1302
      %v1304 = vshrl.u32 %v1286, 16
      %v1306 = vor.u32 %v1304, %v1302
      %v1308 = vshll.u32 %v1287, 16
      %v1310 = vrot.slane %v1308, 1
      %v1311 = vsel %vm1291, %v1306, %v1310
      %v1312 = vshrl.u32 %v1287, 16
      %v1314 = vor.u32 %v1312, %v1310
      %v1316 = vshll.u32 %v1288, 16
      %v1318 = vrot.slane %v1316, 1
      %v1319 = vsel %vm1291, %v1314, %v1318
      %v1320 = vshrl.u32 %v1288, 16
      %v1322 = vor.u32 %v1320, %v1318
      %v1324 = vshll.u32 %v1289, 16
      %v1326 = vrot.slane %v1324, 1
      %v1327 = vsel %vm1291, %v1322, %v1326
      %v1328 = vshrl.u32 %v1289, 16
      %v1330 = vor.u32 %v1328, %v1326
      %v1332 = vshll.u32 %v1290, 16
      %v1334 = vrot.slane %v1332, 1
      %v1335 = vsel %vm1291, %v1330, %v1334
      %v1337 = vsel %vm994, %v1303, 0
      %v1340 = vsel %vm994, %v1311, 0
      %v1343 = vsel %vm994, %v1319, 0
      %v1346 = vsel %vm994, %v1327, 0
      %v1349 = vsel %vm994, %v1335, 0
      %v1352 = vsel %vm381, %v1262, 0
      %1354 = vmatpush.bf16.msra.mxu0 0
      %1355 = vmatpush.bf16.msra.mxu0 0
      %1356 = vmatpush.bf16.msra.mxu0 0
      %1357 = vmatpush.bf16.msra.mxu0 0
      %1358 = vmatpush.bf16.msra.mxu0 0
      %1359 = vmatpush.bf16.msra.mxu0 0
      %1360 = vmatpush.bf16.msra.mxu0 0
      %1361 = vmatpush.bf16.msra.mxu0 %v1352
      %1362 = vmatmul.bf16.gmra.mxu0 %v1337
      %v1363 = vpop.f32.mrf.mxu0
      %v1364 = vadd.f32 0.0, %v1363
      %v1365 = vpop.f32.mrf.mxu0
      %v1366 = vadd.f32 0.0, %v1365
      %1367 = vmatmul.bf16.gmra.mxu0 %v1340
      %v1368 = vpop.f32.mrf.mxu0
      %v1369 = vadd.f32 0.0, %v1368
      %v1370 = vpop.f32.mrf.mxu0
      %v1371 = vadd.f32 0.0, %v1370
      %1372 = vmatmul.bf16.gmra.mxu0 %v1343
      %v1373 = vpop.f32.mrf.mxu0
      %v1374 = vadd.f32 0.0, %v1373
      %v1375 = vpop.f32.mrf.mxu0
      %v1376 = vadd.f32 0.0, %v1375
      %1377 = vmatmul.bf16.gmra.mxu0 %v1346
      %v1378 = vpop.f32.mrf.mxu0
      %v1379 = vadd.f32 0.0, %v1378
      %v1380 = vpop.f32.mrf.mxu0
      %v1381 = vadd.f32 0.0, %v1380
      %1382 = vmatmul.bf16.gmra.mxu0 %v1349
      %v1383 = vpop.f32.mrf.mxu0
      %v1384 = vadd.f32 0.0, %v1383
      %v1385 = vpop.f32.mrf.mxu0
      %v1386 = vadd.f32 0.0, %v1385
      %1387 = vdwg.mxu0
      %v1388 = vadd.f32 %v1240, %v1364
      %v1389 = vadd.f32 %v1241, %v1366
      %v1390 = vadd.f32 %v1242, %v1369
      %v1391 = vadd.f32 %v1243, %v1371
      %v1392 = vadd.f32 %v1244, %v1374
      %v1393 = vadd.f32 %v1245, %v1376
      %v1394 = vadd.f32 %v1246, %v1379
      %v1395 = vadd.f32 %v1247, %v1381
      %v1396 = vadd.f32 %v1248, %v1384
      %v1397 = vadd.f32 %v1249, %v1386
      %v1398 = vld [vmem:[%s511 + $0x8] sm:$0xf]
      %v1399 = vld [vmem:[%s511 + $0xc] sm:$0xf]
      %v1400 = vld [vmem:[%s511 + $0x10] sm:$0xf]
      %v1401 = vld [vmem:[%s511 + $0x14] sm:$0xf]
      %v1402 = vld [vmem:[%s511 + $0x18] sm:$0xf]
      %v1403 = vld [vmem:[%s511 + $0x1c] sm:$0xf]
      %v1404 = vld [vmem:[%s511 + $0x20] sm:$0xf]
      %v1405 = vld [vmem:[%s511 + $0x24] sm:$0xf]
      %v1406 = vld [vmem:[%s511 + $0x28] sm:$0xf]
      %v1407 = vld [vmem:[%s511 + $0x2c] sm:$0xf]
      %v1408 = vld [vmem:[%s511 + $0x30] sm:$0x1]
      %s1409 = scalar_lea.vmem %s3, 16
      %v1410 = vld [vmem:[%s1409] sm:$0xf]
      %v1422 = vunpack.c.l.b16 %v1398
      %v1423 = vunpack.c.l.b16 %v1399
      %v1424 = vunpack.c.l.b16 %v1400
      %v1425 = vunpack.c.l.b16 %v1401
      %v1426 = vunpack.c.l.b16 %v1402
      %v1427 = vunpack.c.l.b16 %v1403
      %v1428 = vunpack.c.l.b16 %v1404
      %v1429 = vunpack.c.l.b16 %v1405
      %v1430 = vunpack.c.l.b16 %v1406
      %v1431 = vunpack.c.l.b16 %v1407
      %v1432 = vunpack.c.l.b16 %v1408
      %v1433 = vpack.c.b16 %v1423, %v1422
      %v1434 = vpack.c.b16 %v1425, %v1424
      %v1435 = vpack.c.b16 %v1427, %v1426
      %v1436 = vpack.c.b16 %v1429, %v1428
      %v1437 = vpack.c.b16 %v1431, %v1430
      %v1438 = vpack.c.b16 %v1432, %v1432
      %v1440 = vshrl.u32 %v1433, 16
      %v1442 = vshll.u32 %v1433, 16
      %v1444 = vrot.slane %v1442, 1
      %v1445 = vor.u32 %v1440, %v1444
      %v1447 = vshll.u32 %v1434, 16
      %v1449 = vrot.slane %v1447, 1
      %v1450 = vsel %vm1291, %v1445, %v1449
      %v1451 = vshrl.u32 %v1434, 16
      %v1453 = vor.u32 %v1451, %v1449
      %v1455 = vshll.u32 %v1435, 16
      %v1457 = vrot.slane %v1455, 1
      %v1458 = vsel %vm1291, %v1453, %v1457
      %v1459 = vshrl.u32 %v1435, 16
      %v1461 = vor.u32 %v1459, %v1457
      %v1463 = vshll.u32 %v1436, 16
      %v1465 = vrot.slane %v1463, 1
      %v1466 = vsel %vm1291, %v1461, %v1465
      %v1467 = vshrl.u32 %v1436, 16
      %v1469 = vor.u32 %v1467, %v1465
      %v1471 = vshll.u32 %v1437, 16
      %v1473 = vrot.slane %v1471, 1
      %v1474 = vsel %vm1291, %v1469, %v1473
      %v1475 = vshrl.u32 %v1437, 16
      %v1477 = vor.u32 %v1475, %v1473
      %v1479 = vshll.u32 %v1438, 16
      %v1481 = vrot.slane %v1479, 1
      %v1482 = vsel %vm1291, %v1477, %v1481
      %v1484 = vsel %vm994, %v1450, 0
      %v1487 = vsel %vm994, %v1458, 0
      %v1490 = vsel %vm994, %v1466, 0
      %v1493 = vsel %vm994, %v1474, 0
      %v1496 = vsel %vm994, %v1482, 0
      %v1499 = vsel %vm381, %v1410, 0
      %1501 = vmatpush.bf16.msra.mxu0 0
      %1502 = vmatpush.bf16.msra.mxu0 0
      %1503 = vmatpush.bf16.msra.mxu0 0
      %1504 = vmatpush.bf16.msra.mxu0 0
      %1505 = vmatpush.bf16.msra.mxu0 0
      %1506 = vmatpush.bf16.msra.mxu0 0
      %1507 = vmatpush.bf16.msra.mxu0 0
      %1508 = vmatpush.bf16.msra.mxu0 %v1499
      %1509 = vmatmul.bf16.gmra.mxu0 %v1484
      %v1510 = vpop.f32.mrf.mxu0
      %v1511 = vadd.f32 0.0, %v1510
      %v1512 = vpop.f32.mrf.mxu0
      %v1513 = vadd.f32 0.0, %v1512
      %1514 = vmatmul.bf16.gmra.mxu0 %v1487
      %v1515 = vpop.f32.mrf.mxu0
      %v1516 = vadd.f32 0.0, %v1515
      %v1517 = vpop.f32.mrf.mxu0
      %v1518 = vadd.f32 0.0, %v1517
      %1519 = vmatmul.bf16.gmra.mxu0 %v1490
      %v1520 = vpop.f32.mrf.mxu0
      %v1521 = vadd.f32 0.0, %v1520
      %v1522 = vpop.f32.mrf.mxu0
      %v1523 = vadd.f32 0.0, %v1522
      %1524 = vmatmul.bf16.gmra.mxu0 %v1493
      %v1525 = vpop.f32.mrf.mxu0
      %v1526 = vadd.f32 0.0, %v1525
      %v1527 = vpop.f32.mrf.mxu0
      %v1528 = vadd.f32 0.0, %v1527
      %1529 = vmatmul.bf16.gmra.mxu0 %v1496
      %v1530 = vpop.f32.mrf.mxu0
      %v1531 = vadd.f32 0.0, %v1530
      %v1532 = vpop.f32.mrf.mxu0
      %v1533 = vadd.f32 0.0, %v1532
      %1534 = vdwg.mxu0
      %v1535 = vadd.f32 %v1388, %v1511
      %v1536 = vadd.f32 %v1389, %v1513
      %v1537 = vadd.f32 %v1390, %v1516
      %v1538 = vadd.f32 %v1391, %v1518
      %v1539 = vadd.f32 %v1392, %v1521
      %v1540 = vadd.f32 %v1393, %v1523
      %v1541 = vadd.f32 %v1394, %v1526
      %v1542 = vadd.f32 %v1395, %v1528
      %v1543 = vadd.f32 %v1396, %v1531
      %v1544 = vadd.f32 %v1397, %v1533
      %v1545 = vld [vmem:[#allocation2 + $0x8] sm:$0xe]
      %v1546 = vld [vmem:[#allocation2 + $0xc] sm:$0xf]
      %v1547 = vld [vmem:[#allocation2 + $0x10] sm:$0xf]
      %v1548 = vld [vmem:[#allocation2 + $0x14] sm:$0xf]
      %v1549 = vld [vmem:[#allocation2 + $0x18] sm:$0xf]
      %v1550 = vld [vmem:[#allocation2 + $0x1c] sm:$0xf]
      %v1551 = vld [vmem:[#allocation2 + $0x20] sm:$0xf]
      %v1552 = vld [vmem:[#allocation2 + $0x24] sm:$0xf]
      %v1553 = vld [vmem:[#allocation2 + $0x28] sm:$0xf]
      %v1554 = vld [vmem:[#allocation2 + $0x2c] sm:$0xf]
      %v1555 = vld [vmem:[#allocation2 + $0x30] sm:$0x1]
      %s1556 = scalar_lea.vmem %s3, 20
      %v1557 = vld [vmem:[%s1556] sm:$0xf]
      %v1569 = vunpack.c.l.b16 %v1545
      %v1570 = vunpack.c.l.b16 %v1546
      %v1571 = vunpack.c.l.b16 %v1547
      %v1572 = vunpack.c.l.b16 %v1548
      %v1573 = vunpack.c.l.b16 %v1549
      %v1574 = vunpack.c.l.b16 %v1550
      %v1575 = vunpack.c.l.b16 %v1551
      %v1576 = vunpack.c.l.b16 %v1552
      %v1577 = vunpack.c.l.b16 %v1553
      %v1578 = vunpack.c.l.b16 %v1554
      %v1579 = vunpack.c.l.b16 %v1555
      %v1580 = vpack.c.b16 %v1570, %v1569
      %v1581 = vpack.c.b16 %v1572, %v1571
      %v1582 = vpack.c.b16 %v1574, %v1573
      %v1583 = vpack.c.b16 %v1576, %v1575
      %v1584 = vpack.c.b16 %v1578, %v1577
      %v1585 = vpack.c.b16 %v1579, %v1579
      %vm1586 = vcmask 1046528
      %v1587 = vrot.slane %v1580, 1
      %v1588 = vrot.slane %v1581, 1
      %v1589 = vsel %vm1586, %v1587, %v1588
      %v1590 = vrot.slane %v1582, 1
      %v1591 = vsel %vm1586, %v1588, %v1590
      %v1592 = vrot.slane %v1583, 1
      %v1593 = vsel %vm1586, %v1590, %v1592
      %v1594 = vrot.slane %v1584, 1
      %v1595 = vsel %vm1586, %v1592, %v1594
      %v1596 = vrot.slane %v1585, 1
      %v1597 = vsel %vm1586, %v1594, %v1596
      %v1599 = vsel %vm994, %v1589, 0
      %v1602 = vsel %vm994, %v1591, 0
      %v1605 = vsel %vm994, %v1593, 0
      %v1608 = vsel %vm994, %v1595, 0
      %v1611 = vsel %vm994, %v1597, 0
      %v1614 = vsel %vm381, %v1557, 0
      %1616 = vmatpush.bf16.msra.mxu0 0
      %1617 = vmatpush.bf16.msra.mxu0 0
      %1618 = vmatpush.bf16.msra.mxu0 0
      %1619 = vmatpush.bf16.msra.mxu0 0
      %1620 = vmatpush.bf16.msra.mxu0 0
      %1621 = vmatpush.bf16.msra.mxu0 0
      %1622 = vmatpush.bf16.msra.mxu0 0
      %1623 = vmatpush.bf16.msra.mxu0 %v1614
      %1624 = vmatmul.bf16.gmra.mxu0 %v1599
      %v1625 = vpop.f32.mrf.mxu0
      %v1626 = vadd.f32 0.0, %v1625
      %v1627 = vpop.f32.mrf.mxu0
      %v1628 = vadd.f32 0.0, %v1627
      %1629 = vmatmul.bf16.gmra.mxu0 %v1602
      %v1630 = vpop.f32.mrf.mxu0
      %v1631 = vadd.f32 0.0, %v1630
      %v1632 = vpop.f32.mrf.mxu0
      %v1633 = vadd.f32 0.0, %v1632
      %1634 = vmatmul.bf16.gmra.mxu0 %v1605
      %v1635 = vpop.f32.mrf.mxu0
      %v1636 = vadd.f32 0.0, %v1635
      %v1637 = vpop.f32.mrf.mxu0
      %v1638 = vadd.f32 0.0, %v1637
      %1639 = vmatmul.bf16.gmra.mxu0 %v1608
      %v1640 = vpop.f32.mrf.mxu0
      %v1641 = vadd.f32 0.0, %v1640
      %v1642 = vpop.f32.mrf.mxu0
      %v1643 = vadd.f32 0.0, %v1642
      %1644 = vmatmul.bf16.gmra.mxu0 %v1611
      %v1645 = vpop.f32.mrf.mxu0
      %v1646 = vadd.f32 0.0, %v1645
      %v1647 = vpop.f32.mrf.mxu0
      %v1648 = vadd.f32 0.0, %v1647
      %1649 = vdwg.mxu0
      %v1650 = vadd.f32 %v1535, %v1626
      %v1651 = vadd.f32 %v1536, %v1628
      %v1652 = vadd.f32 %v1537, %v1631
      %v1653 = vadd.f32 %v1538, %v1633
      %v1654 = vadd.f32 %v1539, %v1636
      %v1655 = vadd.f32 %v1540, %v1638
      %v1656 = vadd.f32 %v1541, %v1641
      %v1657 = vadd.f32 %v1542, %v1643
      %v1658 = vadd.f32 %v1543, %v1646
      %v1659 = vadd.f32 %v1544, %v1648
      %v1660 = vld [vmem:[%s511 + $0x8] sm:$0xe]
      %s1661 = scalar_lea.vmem %s3, 24
      %v1662 = vld [vmem:[%s1661] sm:$0xf]
      %v1664 = vunpack.c.l.b16 %v1660
      %v1665 = vpack.c.b16 %v1423, %v1664
      %v1666 = vrot.slane %v1665, 1
      %v1667 = vrot.slane %v1434, 1
      %v1668 = vsel %vm1586, %v1666, %v1667
      %v1669 = vrot.slane %v1435, 1
      %v1670 = vsel %vm1586, %v1667, %v1669
      %v1671 = vrot.slane %v1436, 1
      %v1672 = vsel %vm1586, %v1669, %v1671
      %v1673 = vrot.slane %v1437, 1
      %v1674 = vsel %vm1586, %v1671, %v1673
      %v1675 = vrot.slane %v1438, 1
      %v1676 = vsel %vm1586, %v1673, %v1675
      %v1678 = vsel %vm994, %v1668, 0
      %v1681 = vsel %vm994, %v1670, 0
      %v1684 = vsel %vm994, %v1672, 0
      %v1687 = vsel %vm994, %v1674, 0
      %v1690 = vsel %vm994, %v1676, 0
      %v1693 = vsel %vm381, %v1662, 0
      %1695 = vmatpush.bf16.msra.mxu0 0
      %1696 = vmatpush.bf16.msra.mxu0 0
      %1697 = vmatpush.bf16.msra.mxu0 0
      %1698 = vmatpush.bf16.msra.mxu0 0
      %1699 = vmatpush.bf16.msra.mxu0 0
      %1700 = vmatpush.bf16.msra.mxu0 0
      %1701 = vmatpush.bf16.msra.mxu0 0
      %1702 = vmatpush.bf16.msra.mxu0 %v1693
      %1703 = vmatmul.bf16.gmra.mxu0 %v1678
      %v1704 = vpop.f32.mrf.mxu0
      %v1705 = vadd.f32 0.0, %v1704
      %v1706 = vpop.f32.mrf.mxu0
      %v1707 = vadd.f32 0.0, %v1706
      %1708 = vmatmul.bf16.gmra.mxu0 %v1681
      %v1709 = vpop.f32.mrf.mxu0
      %v1710 = vadd.f32 0.0, %v1709
      %v1711 = vpop.f32.mrf.mxu0
      %v1712 = vadd.f32 0.0, %v1711
      %1713 = vmatmul.bf16.gmra.mxu0 %v1684
      %v1714 = vpop.f32.mrf.mxu0
      %v1715 = vadd.f32 0.0, %v1714
      %v1716 = vpop.f32.mrf.mxu0
      %v1717 = vadd.f32 0.0, %v1716
      %1718 = vmatmul.bf16.gmra.mxu0 %v1687
      %v1719 = vpop.f32.mrf.mxu0
      %v1720 = vadd.f32 0.0, %v1719
      %v1721 = vpop.f32.mrf.mxu0
      %v1722 = vadd.f32 0.0, %v1721
      %1723 = vmatmul.bf16.gmra.mxu0 %v1690
      %v1724 = vpop.f32.mrf.mxu0
      %v1725 = vadd.f32 0.0, %v1724
      %v1726 = vpop.f32.mrf.mxu0
      %v1727 = vadd.f32 0.0, %v1726
      %1728 = vdwg.mxu0
      %v1729 = vadd.f32 %v1650, %v1705
      %v1730 = vadd.f32 %v1651, %v1707
      %v1731 = vadd.f32 %v1652, %v1710
      %v1732 = vadd.f32 %v1653, %v1712
      %v1733 = vadd.f32 %v1654, %v1715
      %v1734 = vadd.f32 %v1655, %v1717
      %v1735 = vadd.f32 %v1656, %v1720
      %v1736 = vadd.f32 %v1657, %v1722
      %v1737 = vadd.f32 %v1658, %v1725
      %v1738 = vadd.f32 %v1659, %v1727
      %v1739 = vld [vmem:[#allocation2 + $0x30] sm:$0x3]
      %s1740 = scalar_lea.vmem %s3, 28
      %v1741 = vld [vmem:[%s1740] sm:$0xf]
      %v1743 = vunpack.c.l.b16 %v1739
      %v1744 = vpack.c.b16 %v1743, %v1743
      %vm1745 = vsmask.f32 6400
      %v1747 = vshrl.u32 %v1580, 16
      %v1749 = vrot.slane %v1747, 1
      %v1750 = vshll.u32 %v1580, 16
      %v1752 = vrot.slane %v1750, 2
      %v1753 = vor.u32 %v1749, %v1752
      %v1755 = vshrl.u32 %v1581, 16
      %v1757 = vrot.slane %v1755, 1
      %v1758 = vshll.u32 %v1581, 16
      %v1760 = vrot.slane %v1758, 2
      %v1761 = vor.u32 %v1757, %v1760
      %v1762 = vsel %vm1745, %v1753, %v1761
      %v1764 = vshrl.u32 %v1582, 16
      %v1766 = vrot.slane %v1764, 1
      %v1767 = vshll.u32 %v1582, 16
      %v1769 = vrot.slane %v1767, 2
      %v1770 = vor.u32 %v1766, %v1769
      %v1771 = vsel %vm1745, %v1761, %v1770
      %v1773 = vshrl.u32 %v1583, 16
      %v1775 = vrot.slane %v1773, 1
      %v1776 = vshll.u32 %v1583, 16
      %v1778 = vrot.slane %v1776, 2
      %v1779 = vor.u32 %v1775, %v1778
      %v1780 = vsel %vm1745, %v1770, %v1779
      %v1782 = vshrl.u32 %v1584, 16
      %v1784 = vrot.slane %v1782, 1
      %v1785 = vshll.u32 %v1584, 16
      %v1787 = vrot.slane %v1785, 2
      %v1788 = vor.u32 %v1784, %v1787
      %v1789 = vsel %vm1745, %v1779, %v1788
      %v1791 = vshrl.u32 %v1744, 16
      %v1793 = vrot.slane %v1791, 1
      %v1794 = vshll.u32 %v1744, 16
      %v1796 = vrot.slane %v1794, 2
      %v1797 = vor.u32 %v1793, %v1796
      %v1798 = vsel %vm1745, %v1788, %v1797
      %v1800 = vsel %vm994, %v1762, 0
      %v1803 = vsel %vm994, %v1771, 0
      %v1806 = vsel %vm994, %v1780, 0
      %v1809 = vsel %vm994, %v1789, 0
      %v1812 = vsel %vm994, %v1798, 0
      %v1815 = vsel %vm381, %v1741, 0
      %1817 = vmatpush.bf16.msra.mxu0 0
      %1818 = vmatpush.bf16.msra.mxu0 0
      %1819 = vmatpush.bf16.msra.mxu0 0
      %1820 = vmatpush.bf16.msra.mxu0 0
      %1821 = vmatpush.bf16.msra.mxu0 0
      %1822 = vmatpush.bf16.msra.mxu0 0
      %1823 = vmatpush.bf16.msra.mxu0 0
      %1824 = vmatpush.bf16.msra.mxu0 %v1815
      %1825 = vmatmul.bf16.gmra.mxu0 %v1800
      %v1826 = vpop.f32.mrf.mxu0
      %v1827 = vadd.f32 0.0, %v1826
      %v1828 = vpop.f32.mrf.mxu0
      %v1829 = vadd.f32 0.0, %v1828
      %1830 = vmatmul.bf16.gmra.mxu0 %v1803
      %v1831 = vpop.f32.mrf.mxu0
      %v1832 = vadd.f32 0.0, %v1831
      %v1833 = vpop.f32.mrf.mxu0
      %v1834 = vadd.f32 0.0, %v1833
      %1835 = vmatmul.bf16.gmra.mxu0 %v1806
      %v1836 = vpop.f32.mrf.mxu0
      %v1837 = vadd.f32 0.0, %v1836
      %v1838 = vpop.f32.mrf.mxu0
      %v1839 = vadd.f32 0.0, %v1838
      %1840 = vmatmul.bf16.gmra.mxu0 %v1809
      %v1841 = vpop.f32.mrf.mxu0
      %v1842 = vadd.f32 0.0, %v1841
      %v1843 = vpop.f32.mrf.mxu0
      %v1844 = vadd.f32 0.0, %v1843
      %1845 = vmatmul.bf16.gmra.mxu0 %v1812
      %v1846 = vpop.f32.mrf.mxu0
      %v1847 = vadd.f32 0.0, %v1846
      %v1848 = vpop.f32.mrf.mxu0
      %v1849 = vadd.f32 0.0, %v1848
      %1850 = vdwg.mxu0
      %v1851 = vadd.f32 %v1729, %v1827
      %v1852 = vadd.f32 %v1730, %v1829
      %v1853 = vadd.f32 %v1731, %v1832
      %v1854 = vadd.f32 %v1732, %v1834
      %v1855 = vadd.f32 %v1733, %v1837
      %v1856 = vadd.f32 %v1734, %v1839
      %v1857 = vadd.f32 %v1735, %v1842
      %v1858 = vadd.f32 %v1736, %v1844
      %v1859 = vadd.f32 %v1737, %v1847
      %v1860 = vadd.f32 %v1738, %v1849
      %v1861 = vld [vmem:[%s617 + $0x8] sm:$0xf]
      %v1862 = vld [vmem:[%s617 + $0xc] sm:$0xf]
      %v1863 = vld [vmem:[%s617 + $0x10] sm:$0xf]
      %v1864 = vld [vmem:[%s617 + $0x14] sm:$0xf]
      %v1865 = vld [vmem:[%s617 + $0x18] sm:$0xf]
      %v1866 = vld [vmem:[%s617 + $0x1c] sm:$0xf]
      %v1867 = vld [vmem:[%s617 + $0x20] sm:$0xf]
      %v1868 = vld [vmem:[%s617 + $0x24] sm:$0xf]
      %v1869 = vld [vmem:[%s617 + $0x28] sm:$0xf]
      %v1870 = vld [vmem:[%s617 + $0x2c] sm:$0xf]
      %v1871 = vld [vmem:[%s617 + $0x30] sm:$0x1]
      %s1872 = scalar_lea.vmem %s3, 32
      %v1873 = vld [vmem:[%s1872] sm:$0xf]
      %v1885 = vunpack.c.l.b16 %v1861
      %v1886 = vunpack.c.l.b16 %v1862
      %v1887 = vunpack.c.l.b16 %v1863
      %v1888 = vunpack.c.l.b16 %v1864
      %v1889 = vunpack.c.l.b16 %v1865
      %v1890 = vunpack.c.l.b16 %v1866
      %v1891 = vunpack.c.l.b16 %v1867
      %v1892 = vunpack.c.l.b16 %v1868
      %v1893 = vunpack.c.l.b16 %v1869
      %v1894 = vunpack.c.l.b16 %v1870
      %v1895 = vunpack.c.l.b16 %v1871
      %v1896 = vpack.c.b16 %v1886, %v1885
      %v1897 = vpack.c.b16 %v1888, %v1887
      %v1898 = vpack.c.b16 %v1890, %v1889
      %v1899 = vpack.c.b16 %v1892, %v1891
      %v1900 = vpack.c.b16 %v1894, %v1893
      %v1901 = vpack.c.b16 %v1895, %v1895
      %v1903 = vshrl.u32 %v1896, 16
      %v1905 = vshll.u32 %v1896, 16
      %v1907 = vrot.slane %v1905, 1
      %v1908 = vor.u32 %v1903, %v1907
      %v1910 = vshll.u32 %v1897, 16
      %v1912 = vrot.slane %v1910, 1
      %v1913 = vsel %vm1291, %v1908, %v1912
      %v1914 = vshrl.u32 %v1897, 16
      %v1916 = vor.u32 %v1914, %v1912
      %v1918 = vshll.u32 %v1898, 16
      %v1920 = vrot.slane %v1918, 1
      %v1921 = vsel %vm1291, %v1916, %v1920
      %v1922 = vshrl.u32 %v1898, 16
      %v1924 = vor.u32 %v1922, %v1920
      %v1926 = vshll.u32 %v1899, 16
      %v1928 = vrot.slane %v1926, 1
      %v1929 = vsel %vm1291, %v1924, %v1928
      %v1930 = vshrl.u32 %v1899, 16
      %v1932 = vor.u32 %v1930, %v1928
      %v1934 = vshll.u32 %v1900, 16
      %v1936 = vrot.slane %v1934, 1
      %v1937 = vsel %vm1291, %v1932, %v1936
      %v1938 = vshrl.u32 %v1900, 16
      %v1940 = vor.u32 %v1938, %v1936
      %v1942 = vshll.u32 %v1901, 16
      %v1944 = vrot.slane %v1942, 1
      %v1945 = vsel %vm1291, %v1940, %v1944
      %v1947 = vsel %vm994, %v1913, 0
      %v1950 = vsel %vm994, %v1921, 0
      %v1953 = vsel %vm994, %v1929, 0
      %v1956 = vsel %vm994, %v1937, 0
      %v1959 = vsel %vm994, %v1945, 0
      %v1962 = vsel %vm381, %v1873, 0
      %1964 = vmatpush.bf16.msra.mxu0 0
      %1965 = vmatpush.bf16.msra.mxu0 0
      %1966 = vmatpush.bf16.msra.mxu0 0
      %1967 = vmatpush.bf16.msra.mxu0 0
      %1968 = vmatpush.bf16.msra.mxu0 0
      %1969 = vmatpush.bf16.msra.mxu0 0
      %1970 = vmatpush.bf16.msra.mxu0 0
      %1971 = vmatpush.bf16.msra.mxu0 %v1962
      %1972 = vmatmul.bf16.gmra.mxu0 %v1947
      %v1973 = vpop.f32.mrf.mxu0
      %v1974 = vadd.f32 0.0, %v1973
      %v1975 = vpop.f32.mrf.mxu0
      %v1976 = vadd.f32 0.0, %v1975
      %1977 = vmatmul.bf16.gmra.mxu0 %v1950
      %v1978 = vpop.f32.mrf.mxu0
      %v1979 = vadd.f32 0.0, %v1978
      %v1980 = vpop.f32.mrf.mxu0
      %v1981 = vadd.f32 0.0, %v1980
      %1982 = vmatmul.bf16.gmra.mxu0 %v1953
      %v1983 = vpop.f32.mrf.mxu0
      %v1984 = vadd.f32 0.0, %v1983
      %v1985 = vpop.f32.mrf.mxu0
      %v1986 = vadd.f32 0.0, %v1985
      %1987 = vmatmul.bf16.gmra.mxu0 %v1956
      %v1988 = vpop.f32.mrf.mxu0
      %v1989 = vadd.f32 0.0, %v1988
      %v1990 = vpop.f32.mrf.mxu0
      %v1991 = vadd.f32 0.0, %v1990
      %1992 = vmatmul.bf16.gmra.mxu0 %v1959
      %v1993 = vpop.f32.mrf.mxu0
      %v1994 = vadd.f32 0.0, %v1993
      %v1995 = vpop.f32.mrf.mxu0
      %v1996 = vadd.f32 0.0, %v1995
      %1997 = vdwg.mxu0
      %v1998 = vadd.f32 %v1851, %v1974
      %v1999 = vadd.f32 %v1852, %v1976
      %v2000 = vadd.f32 %v1853, %v1979
      %v2001 = vadd.f32 %v1854, %v1981
      %v2002 = vadd.f32 %v1855, %v1984
      %v2003 = vadd.f32 %v1856, %v1986
      %v2004 = vadd.f32 %v1857, %v1989
      %v2005 = vadd.f32 %v1858, %v1991
      %v2006 = vadd.f32 %v1859, %v1994
      %v2007 = vadd.f32 %v1860, %v1996
      %v2008 = vld [vmem:[%s564 + $0x8] sm:$0xe]
      %v2009 = vld [vmem:[%s564 + $0xc] sm:$0xf]
      %v2010 = vld [vmem:[%s564 + $0x10] sm:$0xf]
      %v2011 = vld [vmem:[%s564 + $0x14] sm:$0xf]
      %v2012 = vld [vmem:[%s564 + $0x18] sm:$0xf]
      %v2013 = vld [vmem:[%s564 + $0x1c] sm:$0xf]
      %v2014 = vld [vmem:[%s564 + $0x20] sm:$0xf]
      %v2015 = vld [vmem:[%s564 + $0x24] sm:$0xf]
      %v2016 = vld [vmem:[%s564 + $0x28] sm:$0xf]
      %v2017 = vld [vmem:[%s564 + $0x2c] sm:$0xf]
      %v2018 = vld [vmem:[%s564 + $0x30] sm:$0x1]
      %s2019 = scalar_lea.vmem %s3, 36
      %v2020 = vld [vmem:[%s2019] sm:$0xf]
      %v2032 = vunpack.c.l.b16 %v2008
      %v2033 = vunpack.c.l.b16 %v2009
      %v2034 = vunpack.c.l.b16 %v2010
      %v2035 = vunpack.c.l.b16 %v2011
      %v2036 = vunpack.c.l.b16 %v2012
      %v2037 = vunpack.c.l.b16 %v2013
      %v2038 = vunpack.c.l.b16 %v2014
      %v2039 = vunpack.c.l.b16 %v2015
      %v2040 = vunpack.c.l.b16 %v2016
      %v2041 = vunpack.c.l.b16 %v2017
      %v2042 = vunpack.c.l.b16 %v2018
      %v2043 = vpack.c.b16 %v2033, %v2032
      %v2044 = vpack.c.b16 %v2035, %v2034
      %v2045 = vpack.c.b16 %v2037, %v2036
      %v2046 = vpack.c.b16 %v2039, %v2038
      %v2047 = vpack.c.b16 %v2041, %v2040
      %v2048 = vpack.c.b16 %v2042, %v2042
      %v2049 = vrot.slane %v2043, 1
      %v2050 = vrot.slane %v2044, 1
      %v2051 = vsel %vm1586, %v2049, %v2050
      %v2052 = vrot.slane %v2045, 1
      %v2053 = vsel %vm1586, %v2050, %v2052
      %v2054 = vrot.slane %v2046, 1
      %v2055 = vsel %vm1586, %v2052, %v2054
      %v2056 = vrot.slane %v2047, 1
      %v2057 = vsel %vm1586, %v2054, %v2056
      %v2058 = vrot.slane %v2048, 1
      %v2059 = vsel %vm1586, %v2056, %v2058
      %v2061 = vsel %vm994, %v2051, 0
      %v2064 = vsel %vm994, %v2053, 0
      %v2067 = vsel %vm994, %v2055, 0
      %v2070 = vsel %vm994, %v2057, 0
      %v2073 = vsel %vm994, %v2059, 0
      %v2076 = vsel %vm381, %v2020, 0
      %2078 = vmatpush.bf16.msra.mxu0 0
      %2079 = vmatpush.bf16.msra.mxu0 0
      %2080 = vmatpush.bf16.msra.mxu0 0
      %2081 = vmatpush.bf16.msra.mxu0 0
      %2082 = vmatpush.bf16.msra.mxu0 0
      %2083 = vmatpush.bf16.msra.mxu0 0
      %2084 = vmatpush.bf16.msra.mxu0 0
      %2085 = vmatpush.bf16.msra.mxu0 %v2076
      %2086 = vmatmul.bf16.gmra.mxu0 %v2061
      %v2087 = vpop.f32.mrf.mxu0
      %v2088 = vadd.f32 0.0, %v2087
      %v2089 = vpop.f32.mrf.mxu0
      %v2090 = vadd.f32 0.0, %v2089
      %2091 = vmatmul.bf16.gmra.mxu0 %v2064
      %v2092 = vpop.f32.mrf.mxu0
      %v2093 = vadd.f32 0.0, %v2092
      %v2094 = vpop.f32.mrf.mxu0
      %v2095 = vadd.f32 0.0, %v2094
      %2096 = vmatmul.bf16.gmra.mxu0 %v2067
      %v2097 = vpop.f32.mrf.mxu0
      %v2098 = vadd.f32 0.0, %v2097
      %v2099 = vpop.f32.mrf.mxu0
      %v2100 = vadd.f32 0.0, %v2099
      %2101 = vmatmul.bf16.gmra.mxu0 %v2070
      %v2102 = vpop.f32.mrf.mxu0
      %v2103 = vadd.f32 0.0, %v2102
      %v2104 = vpop.f32.mrf.mxu0
      %v2105 = vadd.f32 0.0, %v2104
      %2106 = vmatmul.bf16.gmra.mxu0 %v2073
      %v2107 = vpop.f32.mrf.mxu0
      %v2108 = vadd.f32 0.0, %v2107
      %v2109 = vpop.f32.mrf.mxu0
      %v2110 = vadd.f32 0.0, %v2109
      %2111 = vdwg.mxu0
      %v2112 = vadd.f32 %v1998, %v2088
      %v2113 = vadd.f32 %v1999, %v2090
      %v2114 = vadd.f32 %v2000, %v2093
      %v2115 = vadd.f32 %v2001, %v2095
      %v2116 = vadd.f32 %v2002, %v2098
      %v2117 = vadd.f32 %v2003, %v2100
      %v2118 = vadd.f32 %v2004, %v2103
      %v2119 = vadd.f32 %v2005, %v2105
      %v2120 = vadd.f32 %v2006, %v2108
      %v2121 = vadd.f32 %v2007, %v2110
      %v2122 = vld [vmem:[%s617 + $0x8] sm:$0xe]
      %s2123 = scalar_lea.vmem %s3, 40
      %v2124 = vld [vmem:[%s2123] sm:$0xf]
      %v2126 = vunpack.c.l.b16 %v2122
      %v2127 = vpack.c.b16 %v1886, %v2126
      %v2128 = vrot.slane %v2127, 1
      %v2129 = vrot.slane %v1897, 1
      %v2130 = vsel %vm1586, %v2128, %v2129
      %v2131 = vrot.slane %v1898, 1
      %v2132 = vsel %vm1586, %v2129, %v2131
      %v2133 = vrot.slane %v1899, 1
      %v2134 = vsel %vm1586, %v2131, %v2133
      %v2135 = vrot.slane %v1900, 1
      %v2136 = vsel %vm1586, %v2133, %v2135
      %v2137 = vrot.slane %v1901, 1
      %v2138 = vsel %vm1586, %v2135, %v2137
      %v2140 = vsel %vm994, %v2130, 0
      %v2143 = vsel %vm994, %v2132, 0
      %v2146 = vsel %vm994, %v2134, 0
      %v2149 = vsel %vm994, %v2136, 0
      %v2152 = vsel %vm994, %v2138, 0
      %v2155 = vsel %vm381, %v2124, 0
      %2157 = vmatpush.bf16.msra.mxu0 0
      %2158 = vmatpush.bf16.msra.mxu0 0
      %2159 = vmatpush.bf16.msra.mxu0 0
      %2160 = vmatpush.bf16.msra.mxu0 0
      %2161 = vmatpush.bf16.msra.mxu0 0
      %2162 = vmatpush.bf16.msra.mxu0 0
      %2163 = vmatpush.bf16.msra.mxu0 0
      %2164 = vmatpush.bf16.msra.mxu0 %v2155
      %2165 = vmatmul.bf16.gmra.mxu0 %v2140
      %v2166 = vpop.f32.mrf.mxu0
      %v2167 = vadd.f32 0.0, %v2166
      %v2168 = vpop.f32.mrf.mxu0
      %v2169 = vadd.f32 0.0, %v2168
      %2170 = vmatmul.bf16.gmra.mxu0 %v2143
      %v2171 = vpop.f32.mrf.mxu0
      %v2172 = vadd.f32 0.0, %v2171
      %v2173 = vpop.f32.mrf.mxu0
      %v2174 = vadd.f32 0.0, %v2173
      %2175 = vmatmul.bf16.gmra.mxu0 %v2146
      %v2176 = vpop.f32.mrf.mxu0
      %v2177 = vadd.f32 0.0, %v2176
      %v2178 = vpop.f32.mrf.mxu0
      %v2179 = vadd.f32 0.0, %v2178
      %2180 = vmatmul.bf16.gmra.mxu0 %v2149
      %v2181 = vpop.f32.mrf.mxu0
      %v2182 = vadd.f32 0.0, %v2181
      %v2183 = vpop.f32.mrf.mxu0
      %v2184 = vadd.f32 0.0, %v2183
      %2185 = vmatmul.bf16.gmra.mxu0 %v2152
      %v2186 = vpop.f32.mrf.mxu0
      %v2187 = vadd.f32 0.0, %v2186
      %v2188 = vpop.f32.mrf.mxu0
      %v2189 = vadd.f32 0.0, %v2188
      %2190 = vdwg.mxu0
      %v2191 = vadd.f32 %v2112, %v2167
      %v2192 = vadd.f32 %v2113, %v2169
      %v2193 = vadd.f32 %v2114, %v2172
      %v2194 = vadd.f32 %v2115, %v2174
      %v2195 = vadd.f32 %v2116, %v2177
      %v2196 = vadd.f32 %v2117, %v2179
      %v2197 = vadd.f32 %v2118, %v2182
      %v2198 = vadd.f32 %v2119, %v2184
      %v2199 = vadd.f32 %v2120, %v2187
      %v2200 = vadd.f32 %v2121, %v2189
      %v2201 = vld [vmem:[%s564 + $0x30] sm:$0x3]
      %s2202 = scalar_lea.vmem %s3, 44
      %v2203 = vld [vmem:[%s2202] sm:$0xf]
      %v2205 = vunpack.c.l.b16 %v2201
      %v2206 = vpack.c.b16 %v2205, %v2205
      %v2208 = vshrl.u32 %v2043, 16
      %v2210 = vrot.slane %v2208, 1
      %v2211 = vshll.u32 %v2043, 16
      %v2213 = vrot.slane %v2211, 2
      %v2214 = vor.u32 %v2210, %v2213
      %v2216 = vshrl.u32 %v2044, 16
      %v2218 = vrot.slane %v2216, 1
      %v2219 = vshll.u32 %v2044, 16
      %v2221 = vrot.slane %v2219, 2
      %v2222 = vor.u32 %v2218, %v2221
      %v2223 = vsel %vm1745, %v2214, %v2222
      %v2225 = vshrl.u32 %v2045, 16
      %v2227 = vrot.slane %v2225, 1
      %v2228 = vshll.u32 %v2045, 16
      %v2230 = vrot.slane %v2228, 2
      %v2231 = vor.u32 %v2227, %v2230
      %v2232 = vsel %vm1745, %v2222, %v2231
      %v2234 = vshrl.u32 %v2046, 16
      %v2236 = vrot.slane %v2234, 1
      %v2237 = vshll.u32 %v2046, 16
      %v2239 = vrot.slane %v2237, 2
      %v2240 = vor.u32 %v2236, %v2239
      %v2241 = vsel %vm1745, %v2231, %v2240
      %v2243 = vshrl.u32 %v2047, 16
      %v2245 = vrot.slane %v2243, 1
      %v2246 = vshll.u32 %v2047, 16
      %v2248 = vrot.slane %v2246, 2
      %v2249 = vor.u32 %v2245, %v2248
      %v2250 = vsel %vm1745, %v2240, %v2249
      %v2252 = vshrl.u32 %v2206, 16
      %v2254 = vrot.slane %v2252, 1
      %v2255 = vshll.u32 %v2206, 16
      %v2257 = vrot.slane %v2255, 2
      %v2258 = vor.u32 %v2254, %v2257
      %v2259 = vsel %vm1745, %v2249, %v2258
      %v2261 = vsel %vm994, %v2223, 0
      %v2264 = vsel %vm994, %v2232, 0
      %v2267 = vsel %vm994, %v2241, 0
      %v2270 = vsel %vm994, %v2250, 0
      %v2273 = vsel %vm994, %v2259, 0
      %v2276 = vsel %vm381, %v2203, 0
      %2278 = vmatpush.bf16.msra.mxu0 0
      %2279 = vmatpush.bf16.msra.mxu0 0
      %2280 = vmatpush.bf16.msra.mxu0 0
      %2281 = vmatpush.bf16.msra.mxu0 0
      %2282 = vmatpush.bf16.msra.mxu0 0
      %2283 = vmatpush.bf16.msra.mxu0 0
      %2284 = vmatpush.bf16.msra.mxu0 0
      %2285 = vmatpush.bf16.msra.mxu0 %v2276
      %2286 = vmatmul.bf16.gmra.mxu0 %v2261
      %v2287 = vpop.f32.mrf.mxu0
      %v2288 = vadd.f32 0.0, %v2287
      %v2289 = vpop.f32.mrf.mxu0
      %v2290 = vadd.f32 0.0, %v2289
      %2291 = vmatmul.bf16.gmra.mxu0 %v2264
      %v2292 = vpop.f32.mrf.mxu0
      %v2293 = vadd.f32 0.0, %v2292
      %v2294 = vpop.f32.mrf.mxu0
      %v2295 = vadd.f32 0.0, %v2294
      %2296 = vmatmul.bf16.gmra.mxu0 %v2267
      %v2297 = vpop.f32.mrf.mxu0
      %v2298 = vadd.f32 0.0, %v2297
      %v2299 = vpop.f32.mrf.mxu0
      %v2300 = vadd.f32 0.0, %v2299
      %2301 = vmatmul.bf16.gmra.mxu0 %v2270
      %v2302 = vpop.f32.mrf.mxu0
      %v2303 = vadd.f32 0.0, %v2302
      %v2304 = vpop.f32.mrf.mxu0
      %v2305 = vadd.f32 0.0, %v2304
      %2306 = vmatmul.bf16.gmra.mxu0 %v2273
      %v2307 = vpop.f32.mrf.mxu0
      %v2308 = vadd.f32 0.0, %v2307
      %v2309 = vpop.f32.mrf.mxu0
      %v2310 = vadd.f32 0.0, %v2309
      %2311 = vdwg.mxu0
      %v2312 = vadd.f32 %v2191, %v2288
      %v2313 = vadd.f32 %v2192, %v2290
      %v2314 = vadd.f32 %v2193, %v2293
      %v2315 = vadd.f32 %v2194, %v2295
      %v2316 = vadd.f32 %v2195, %v2298
      %v2317 = vadd.f32 %v2196, %v2300
      %v2318 = vadd.f32 %v2197, %v2303
      %v2319 = vadd.f32 %v2198, %v2305
      %v2320 = vadd.f32 %v2199, %v2308
      %v2321 = vadd.f32 %v2200, %v2310
      %v2322 = vld [vmem:[%s511 + $0xc] sm:$0xe]
      %v2323 = vld [vmem:[%s511 + $0x10] sm:$0xf]
      %v2324 = vld [vmem:[%s511 + $0x14] sm:$0xf]
      %v2325 = vld [vmem:[%s511 + $0x18] sm:$0xf]
      %v2326 = vld [vmem:[%s511 + $0x1c] sm:$0xf]
      %v2327 = vld [vmem:[%s511 + $0x20] sm:$0xf]
      %v2328 = vld [vmem:[%s511 + $0x24] sm:$0xf]
      %v2329 = vld [vmem:[%s511 + $0x28] sm:$0xf]
      %v2330 = vld [vmem:[%s511 + $0x2c] sm:$0xf]
      %v2331 = vld [vmem:[%s511 + $0x30] sm:$0xf]
      %v2332 = vld [vmem:[%s511 + $0x34] sm:$0x3]
      %s2333 = scalar_lea.vmem %s3, 48
      %v2334 = vld [vmem:[%s2333] sm:$0xf]
      %v2346 = vunpack.c.l.b16 %v2322
      %v2347 = vunpack.c.l.b16 %v2323
      %v2348 = vunpack.c.l.b16 %v2324
      %v2349 = vunpack.c.l.b16 %v2325
      %v2350 = vunpack.c.l.b16 %v2326
      %v2351 = vunpack.c.l.b16 %v2327
      %v2352 = vunpack.c.l.b16 %v2328
      %v2353 = vunpack.c.l.b16 %v2329
      %v2354 = vunpack.c.l.b16 %v2330
      %v2355 = vunpack.c.l.b16 %v2331
      %v2356 = vunpack.c.l.b16 %v2332
      %v2357 = vpack.c.b16 %v2347, %v2346
      %v2358 = vpack.c.b16 %v2349, %v2348
      %v2359 = vpack.c.b16 %v2351, %v2350
      %v2360 = vpack.c.b16 %v2353, %v2352
      %v2361 = vpack.c.b16 %v2355, %v2354
      %v2362 = vpack.c.b16 %v2356, %v2356
      %v2364 = vshrl.u32 %v2357, 16
      %v2366 = vrot.slane %v2364, 1
      %v2367 = vshll.u32 %v2357, 16
      %v2369 = vrot.slane %v2367, 2
      %v2370 = vor.u32 %v2366, %v2369
      %v2372 = vshrl.u32 %v2358, 16
      %v2374 = vrot.slane %v2372, 1
      %v2375 = vshll.u32 %v2358, 16
      %v2377 = vrot.slane %v2375, 2
      %v2378 = vor.u32 %v2374, %v2377
      %v2379 = vsel %vm1745, %v2370, %v2378
      %v2381 = vshrl.u32 %v2359, 16
      %v2383 = vrot.slane %v2381, 1
      %v2384 = vshll.u32 %v2359, 16
      %v2386 = vrot.slane %v2384, 2
      %v2387 = vor.u32 %v2383, %v2386
      %v2388 = vsel %vm1745, %v2378, %v2387
      %v2390 = vshrl.u32 %v2360, 16
      %v2392 = vrot.slane %v2390, 1
      %v2393 = vshll.u32 %v2360, 16
      %v2395 = vrot.slane %v2393, 2
      %v2396 = vor.u32 %v2392, %v2395
      %v2397 = vsel %vm1745, %v2387, %v2396
      %v2399 = vshrl.u32 %v2361, 16
      %v2401 = vrot.slane %v2399, 1
      %v2402 = vshll.u32 %v2361, 16
      %v2404 = vrot.slane %v2402, 2
      %v2405 = vor.u32 %v2401, %v2404
      %v2406 = vsel %vm1745, %v2396, %v2405
      %v2408 = vshrl.u32 %v2362, 16
      %v2410 = vrot.slane %v2408, 1
      %v2411 = vshll.u32 %v2362, 16
      %v2413 = vrot.slane %v2411, 2
      %v2414 = vor.u32 %v2410, %v2413
      %v2415 = vsel %vm1745, %v2405, %v2414
      %v2417 = vsel %vm994, %v2379, 0
      %v2420 = vsel %vm994, %v2388, 0
      %v2423 = vsel %vm994, %v2397, 0
      %v2426 = vsel %vm994, %v2406, 0
      %v2429 = vsel %vm994, %v2415, 0
      %v2432 = vsel %vm381, %v2334, 0
      %2434 = vmatpush.bf16.msra.mxu0 0
      %2435 = vmatpush.bf16.msra.mxu0 0
      %2436 = vmatpush.bf16.msra.mxu0 0
      %2437 = vmatpush.bf16.msra.mxu0 0
      %2438 = vmatpush.bf16.msra.mxu0 0
      %2439 = vmatpush.bf16.msra.mxu0 0
      %2440 = vmatpush.bf16.msra.mxu0 0
      %2441 = vmatpush.bf16.msra.mxu0 %v2432
      %2442 = vmatmul.bf16.gmra.mxu0 %v2417
      %v2443 = vpop.f32.mrf.mxu0
      %v2444 = vadd.f32 0.0, %v2443
      %v2445 = vpop.f32.mrf.mxu0
      %v2446 = vadd.f32 0.0, %v2445
      %2447 = vmatmul.bf16.gmra.mxu0 %v2420
      %v2448 = vpop.f32.mrf.mxu0
      %v2449 = vadd.f32 0.0, %v2448
      %v2450 = vpop.f32.mrf.mxu0
      %v2451 = vadd.f32 0.0, %v2450
      %2452 = vmatmul.bf16.gmra.mxu0 %v2423
      %v2453 = vpop.f32.mrf.mxu0
      %v2454 = vadd.f32 0.0, %v2453
      %v2455 = vpop.f32.mrf.mxu0
      %v2456 = vadd.f32 0.0, %v2455
      %2457 = vmatmul.bf16.gmra.mxu0 %v2426
      %v2458 = vpop.f32.mrf.mxu0
      %v2459 = vadd.f32 0.0, %v2458
      %v2460 = vpop.f32.mrf.mxu0
      %v2461 = vadd.f32 0.0, %v2460
      %2462 = vmatmul.bf16.gmra.mxu0 %v2429
      %v2463 = vpop.f32.mrf.mxu0
      %v2464 = vadd.f32 0.0, %v2463
      %v2465 = vpop.f32.mrf.mxu0
      %v2466 = vadd.f32 0.0, %v2465
      %2467 = vdwg.mxu0
      %v2468 = vadd.f32 %v2312, %v2444
      %v2469 = vadd.f32 %v2313, %v2446
      %v2470 = vadd.f32 %v2314, %v2449
      %v2471 = vadd.f32 %v2315, %v2451
      %v2472 = vadd.f32 %v2316, %v2454
      %v2473 = vadd.f32 %v2317, %v2456
      %v2474 = vadd.f32 %v2318, %v2459
      %v2475 = vadd.f32 %v2319, %v2461
      %v2476 = vadd.f32 %v2320, %v2464
      %v2477 = vadd.f32 %v2321, %v2466
      %v2478 = vld [vmem:[#allocation2 + $0xc] sm:$0xc]
      %v2479 = vld [vmem:[#allocation2 + $0x10] sm:$0xf]
      %v2480 = vld [vmem:[#allocation2 + $0x14] sm:$0xf]
      %v2481 = vld [vmem:[#allocation2 + $0x18] sm:$0xf]
      %v2482 = vld [vmem:[#allocation2 + $0x1c] sm:$0xf]
      %v2483 = vld [vmem:[#allocation2 + $0x20] sm:$0xf]
      %v2484 = vld [vmem:[#allocation2 + $0x24] sm:$0xf]
      %v2485 = vld [vmem:[#allocation2 + $0x28] sm:$0xf]
      %v2486 = vld [vmem:[#allocation2 + $0x2c] sm:$0xf]
      %v2487 = vld [vmem:[#allocation2 + $0x30] sm:$0xf]
      %v2488 = vld [vmem:[#allocation2 + $0x34] sm:$0x3]
      %s2489 = scalar_lea.vmem %s3, 52
      %v2490 = vld [vmem:[%s2489] sm:$0xf]
      %v2502 = vunpack.c.l.b16 %v2478
      %v2503 = vunpack.c.l.b16 %v2479
      %v2504 = vunpack.c.l.b16 %v2480
      %v2505 = vunpack.c.l.b16 %v2481
      %v2506 = vunpack.c.l.b16 %v2482
      %v2507 = vunpack.c.l.b16 %v2483
      %v2508 = vunpack.c.l.b16 %v2484
      %v2509 = vunpack.c.l.b16 %v2485
      %v2510 = vunpack.c.l.b16 %v2486
      %v2511 = vunpack.c.l.b16 %v2487
      %v2512 = vunpack.c.l.b16 %v2488
      %v2513 = vpack.c.b16 %v2503, %v2502
      %v2514 = vpack.c.b16 %v2505, %v2504
      %v2515 = vpack.c.b16 %v2507, %v2506
      %v2516 = vpack.c.b16 %v2509, %v2508
      %v2517 = vpack.c.b16 %v2511, %v2510
      %v2518 = vpack.c.b16 %v2512, %v2512
      %vm2519 = vcmask 1045504
      %v2520 = vrot.slane %v2513, 2
      %v2521 = vrot.slane %v2514, 2
      %v2522 = vsel %vm2519, %v2520, %v2521
      %v2523 = vrot.slane %v2515, 2
      %v2524 = vsel %vm2519, %v2521, %v2523
      %v2525 = vrot.slane %v2516, 2
      %v2526 = vsel %vm2519, %v2523, %v2525
      %v2527 = vrot.slane %v2517, 2
      %v2528 = vsel %vm2519, %v2525, %v2527
      %v2529 = vrot.slane %v2518, 2
      %v2530 = vsel %vm2519, %v2527, %v2529
      %v2532 = vsel %vm994, %v2522, 0
      %v2535 = vsel %vm994, %v2524, 0
      %v2538 = vsel %vm994, %v2526, 0
      %v2541 = vsel %vm994, %v2528, 0
      %v2544 = vsel %vm994, %v2530, 0
      %v2547 = vsel %vm381, %v2490, 0
      %2549 = vmatpush.bf16.msra.mxu0 0
      %2550 = vmatpush.bf16.msra.mxu0 0
      %2551 = vmatpush.bf16.msra.mxu0 0
      %2552 = vmatpush.bf16.msra.mxu0 0
      %2553 = vmatpush.bf16.msra.mxu0 0
      %2554 = vmatpush.bf16.msra.mxu0 0
      %2555 = vmatpush.bf16.msra.mxu0 0
      %2556 = vmatpush.bf16.msra.mxu0 %v2547
      %2557 = vmatmul.bf16.gmra.mxu0 %v2532
      %v2558 = vpop.f32.mrf.mxu0
      %v2559 = vadd.f32 0.0, %v2558
      %v2560 = vpop.f32.mrf.mxu0
      %v2561 = vadd.f32 0.0, %v2560
      %2562 = vmatmul.bf16.gmra.mxu0 %v2535
      %v2563 = vpop.f32.mrf.mxu0
      %v2564 = vadd.f32 0.0, %v2563
      %v2565 = vpop.f32.mrf.mxu0
      %v2566 = vadd.f32 0.0, %v2565
      %2567 = vmatmul.bf16.gmra.mxu0 %v2538
      %v2568 = vpop.f32.mrf.mxu0
      %v2569 = vadd.f32 0.0, %v2568
      %v2570 = vpop.f32.mrf.mxu0
      %v2571 = vadd.f32 0.0, %v2570
      %2572 = vmatmul.bf16.gmra.mxu0 %v2541
      %v2573 = vpop.f32.mrf.mxu0
      %v2574 = vadd.f32 0.0, %v2573
      %v2575 = vpop.f32.mrf.mxu0
      %v2576 = vadd.f32 0.0, %v2575
      %2577 = vmatmul.bf16.gmra.mxu0 %v2544
      %v2578 = vpop.f32.mrf.mxu0
      %v2579 = vadd.f32 0.0, %v2578
      %v2580 = vpop.f32.mrf.mxu0
      %v2581 = vadd.f32 0.0, %v2580
      %2582 = vdwg.mxu0
      %v2583 = vadd.f32 %v2468, %v2559
      %v2584 = vadd.f32 %v2469, %v2561
      %v2585 = vadd.f32 %v2470, %v2564
      %v2586 = vadd.f32 %v2471, %v2566
      %v2587 = vadd.f32 %v2472, %v2569
      %v2588 = vadd.f32 %v2473, %v2571
      %v2589 = vadd.f32 %v2474, %v2574
      %v2590 = vadd.f32 %v2475, %v2576
      %v2591 = vadd.f32 %v2476, %v2579
      %v2592 = vadd.f32 %v2477, %v2581
      %v2593 = vld [vmem:[%s511 + $0xc] sm:$0xc]
      %s2594 = scalar_lea.vmem %s3, 56
      %v2595 = vld [vmem:[%s2594] sm:$0xf]
      %v2597 = vunpack.c.l.b16 %v2593
      %v2598 = vpack.c.b16 %v2347, %v2597
      %v2599 = vrot.slane %v2598, 2
      %v2600 = vrot.slane %v2358, 2
      %v2601 = vsel %vm2519, %v2599, %v2600
      %v2602 = vrot.slane %v2359, 2
      %v2603 = vsel %vm2519, %v2600, %v2602
      %v2604 = vrot.slane %v2360, 2
      %v2605 = vsel %vm2519, %v2602, %v2604
      %v2606 = vrot.slane %v2361, 2
      %v2607 = vsel %vm2519, %v2604, %v2606
      %v2608 = vrot.slane %v2362, 2
      %v2609 = vsel %vm2519, %v2606, %v2608
      %v2611 = vsel %vm994, %v2601, 0
      %v2614 = vsel %vm994, %v2603, 0
      %v2617 = vsel %vm994, %v2605, 0
      %v2620 = vsel %vm994, %v2607, 0
      %v2623 = vsel %vm994, %v2609, 0
      %v2626 = vsel %vm381, %v2595, 0
      %2628 = vmatpush.bf16.msra.mxu0 0
      %2629 = vmatpush.bf16.msra.mxu0 0
      %2630 = vmatpush.bf16.msra.mxu0 0
      %2631 = vmatpush.bf16.msra.mxu0 0
      %2632 = vmatpush.bf16.msra.mxu0 0
      %2633 = vmatpush.bf16.msra.mxu0 0
      %2634 = vmatpush.bf16.msra.mxu0 0
      %2635 = vmatpush.bf16.msra.mxu0 %v2626
      %2636 = vmatmul.bf16.gmra.mxu0 %v2611
      %v2637 = vpop.f32.mrf.mxu0
      %v2638 = vadd.f32 0.0, %v2637
      %v2639 = vpop.f32.mrf.mxu0
      %v2640 = vadd.f32 0.0, %v2639
      %2641 = vmatmul.bf16.gmra.mxu0 %v2614
      %v2642 = vpop.f32.mrf.mxu0
      %v2643 = vadd.f32 0.0, %v2642
      %v2644 = vpop.f32.mrf.mxu0
      %v2645 = vadd.f32 0.0, %v2644
      %2646 = vmatmul.bf16.gmra.mxu0 %v2617
      %v2647 = vpop.f32.mrf.mxu0
      %v2648 = vadd.f32 0.0, %v2647
      %v2649 = vpop.f32.mrf.mxu0
      %v2650 = vadd.f32 0.0, %v2649
      %2651 = vmatmul.bf16.gmra.mxu0 %v2620
      %v2652 = vpop.f32.mrf.mxu0
      %v2653 = vadd.f32 0.0, %v2652
      %v2654 = vpop.f32.mrf.mxu0
      %v2655 = vadd.f32 0.0, %v2654
      %2656 = vmatmul.bf16.gmra.mxu0 %v2623
      %v2657 = vpop.f32.mrf.mxu0
      %v2658 = vadd.f32 0.0, %v2657
      %v2659 = vpop.f32.mrf.mxu0
      %v2660 = vadd.f32 0.0, %v2659
      %2661 = vdwg.mxu0
      %v2662 = vadd.f32 %v2583, %v2638
      %v2663 = vadd.f32 %v2584, %v2640
      %v2664 = vadd.f32 %v2585, %v2643
      %v2665 = vadd.f32 %v2586, %v2645
      %v2666 = vadd.f32 %v2587, %v2648
      %v2667 = vadd.f32 %v2588, %v2650
      %v2668 = vadd.f32 %v2589, %v2653
      %v2669 = vadd.f32 %v2590, %v2655
      %v2670 = vadd.f32 %v2591, %v2658
      %v2671 = vadd.f32 %v2592, %v2660
      %v2672 = vld [vmem:[#allocation2 + $0x34] sm:$0x7]
      %s2673 = scalar_lea.vmem %s3, 60
      %v2674 = vld [vmem:[%s2673] sm:$0xf]
      %v2676 = vunpack.c.l.b16 %v2672
      %v2677 = vpack.c.b16 %v2676, %v2676
      %vm2678 = vsmask.f32 5376
      %v2680 = vshrl.u32 %v2513, 16
      %v2682 = vrot.slane %v2680, 2
      %v2683 = vshll.u32 %v2513, 16
      %v2685 = vrot.slane %v2683, 3
      %v2686 = vor.u32 %v2682, %v2685
      %v2688 = vshrl.u32 %v2514, 16
      %v2690 = vrot.slane %v2688, 2
      %v2691 = vshll.u32 %v2514, 16
      %v2693 = vrot.slane %v2691, 3
      %v2694 = vor.u32 %v2690, %v2693
      %v2695 = vsel %vm2678, %v2686, %v2694
      %v2697 = vshrl.u32 %v2515, 16
      %v2699 = vrot.slane %v2697, 2
      %v2700 = vshll.u32 %v2515, 16
      %v2702 = vrot.slane %v2700, 3
      %v2703 = vor.u32 %v2699, %v2702
      %v2704 = vsel %vm2678, %v2694, %v2703
      %v2706 = vshrl.u32 %v2516, 16
      %v2708 = vrot.slane %v2706, 2
      %v2709 = vshll.u32 %v2516, 16
      %v2711 = vrot.slane %v2709, 3
      %v2712 = vor.u32 %v2708, %v2711
      %v2713 = vsel %vm2678, %v2703, %v2712
      %v2715 = vshrl.u32 %v2517, 16
      %v2717 = vrot.slane %v2715, 2
      %v2718 = vshll.u32 %v2517, 16
      %v2720 = vrot.slane %v2718, 3
      %v2721 = vor.u32 %v2717, %v2720
      %v2722 = vsel %vm2678, %v2712, %v2721
      %v2724 = vshrl.u32 %v2677, 16
      %v2726 = vrot.slane %v2724, 2
      %v2727 = vshll.u32 %v2677, 16
      %v2729 = vrot.slane %v2727, 3
      %v2730 = vor.u32 %v2726, %v2729
      %v2731 = vsel %vm2678, %v2721, %v2730
      %v2733 = vsel %vm994, %v2695, 0
      %v2736 = vsel %vm994, %v2704, 0
      %v2739 = vsel %vm994, %v2713, 0
      %v2742 = vsel %vm994, %v2722, 0
      %v2745 = vsel %vm994, %v2731, 0
      %v2748 = vsel %vm381, %v2674, 0
      %2750 = vmatpush.bf16.msra.mxu0 0
      %2751 = vmatpush.bf16.msra.mxu0 0
      %2752 = vmatpush.bf16.msra.mxu0 0
      %2753 = vmatpush.bf16.msra.mxu0 0
      %2754 = vmatpush.bf16.msra.mxu0 0
      %2755 = vmatpush.bf16.msra.mxu0 0
      %2756 = vmatpush.bf16.msra.mxu0 0
      %2757 = vmatpush.bf16.msra.mxu0 %v2748
      %2758 = vmatmul.bf16.gmra.mxu0 %v2733
      %v2759 = vpop.f32.mrf.mxu0
      %v2760 = vadd.f32 0.0, %v2759
      %v2761 = vpop.f32.mrf.mxu0
      %v2762 = vadd.f32 0.0, %v2761
      %2763 = vmatmul.bf16.gmra.mxu0 %v2736
      %v2764 = vpop.f32.mrf.mxu0
      %v2765 = vadd.f32 0.0, %v2764
      %v2766 = vpop.f32.mrf.mxu0
      %v2767 = vadd.f32 0.0, %v2766
      %2768 = vmatmul.bf16.gmra.mxu0 %v2739
      %v2769 = vpop.f32.mrf.mxu0
      %v2770 = vadd.f32 0.0, %v2769
      %v2771 = vpop.f32.mrf.mxu0
      %v2772 = vadd.f32 0.0, %v2771
      %2773 = vmatmul.bf16.gmra.mxu0 %v2742
      %v2774 = vpop.f32.mrf.mxu0
      %v2775 = vadd.f32 0.0, %v2774
      %v2776 = vpop.f32.mrf.mxu0
      %v2777 = vadd.f32 0.0, %v2776
      %2778 = vmatmul.bf16.gmra.mxu0 %v2745
      %v2779 = vpop.f32.mrf.mxu0
      %v2780 = vadd.f32 0.0, %v2779
      %v2781 = vpop.f32.mrf.mxu0
      %v2782 = vadd.f32 0.0, %v2781
      %2783 = vdwg.mxu0
      %v2784 = vadd.f32 %v2662, %v2760
      %v2785 = vadd.f32 %v2663, %v2762
      %v2786 = vadd.f32 %v2664, %v2765
      %v2787 = vadd.f32 %v2665, %v2767
      %v2788 = vadd.f32 %v2666, %v2770
      %v2789 = vadd.f32 %v2667, %v2772
      %v2790 = vadd.f32 %v2668, %v2775
      %v2791 = vadd.f32 %v2669, %v2777
      %v2792 = vadd.f32 %v2670, %v2780
      %v2793 = vadd.f32 %v2671, %v2782
      %v2794 = vld [vmem:[%s4] sm:$0x1]
      %v2796 = vperm.slane %v2794, 0
      %v2798 = vadd.f32 %v2784, %v2796
      %v2799 = vadd.f32 %v2785, %v2796
      %v2800 = vadd.f32 %v2786, %v2796
      %v2801 = vadd.f32 %v2787, %v2796
      %v2802 = vadd.f32 %v2788, %v2796
      %v2803 = vadd.f32 %v2789, %v2796
      %v2804 = vadd.f32 %v2790, %v2796
      %v2805 = vadd.f32 %v2791, %v2796
      %v2806 = vadd.f32 %v2792, %v2796
      %v2807 = vadd.f32 %v2793, %v2796
      %v2808 = vmax.f32 %v2798, 0.0
      %v2809 = vmax.f32 %v2799, 0.0
      %v2810 = vmax.f32 %v2800, 0.0
      %v2811 = vmax.f32 %v2801, 0.0
      %v2812 = vmax.f32 %v2802, 0.0
      %v2813 = vmax.f32 %v2803, 0.0
      %v2814 = vmax.f32 %v2804, 0.0
      %v2815 = vmax.f32 %v2805, 0.0
      %v2816 = vmax.f32 %v2806, 0.0
      %v2817 = vmax.f32 %v2807, 0.0
      %vm2818 = vcmask 130048
      %2819 = vst.msk [vmem:[%s294] sm:$0xff] %vm2818, %v2808
      %2820 = vst.msk [vmem:[%s294 + $0x8] sm:$0xff] %vm2818, %v2809
      %2821 = vst.msk [vmem:[%s294 + $0x10] sm:$0xff] %vm2818, %v2810
      %2822 = vst.msk [vmem:[%s294 + $0x18] sm:$0xff] %vm2818, %v2811
      %2823 = vst.msk [vmem:[%s294 + $0x20] sm:$0xff] %vm2818, %v2812
      %2824 = vst.msk [vmem:[%s294 + $0x28] sm:$0xff] %vm2818, %v2813
      %2825 = vst.msk [vmem:[%s294 + $0x30] sm:$0xff] %vm2818, %v2814
      %2826 = vst.msk [vmem:[%s294 + $0x38] sm:$0xff] %vm2818, %v2815
      %2827 = vst.msk [vmem:[%s294 + $0x40] sm:$0xff] %vm2818, %v2816
      %2828 = vst.msk [vmem:[%s294 + $0x48] sm:$0xff] %vm2818, %v2817
      %p2829 = scmp.lt.s32.totalorder %s20, 1
      %s2830 = scalar_select %p2829, %s20, 1
      %p2831 = scmp.lt.s32.totalorder %s21, 0
      %s2832 = scalar_select %p2831, %s21, 0
      %s2833 = smul.addr %s2832, 10
      %s2834 = smul.addr %s2830, 10
      %s2835 = sadd.s32 %s2833, %s2834
      %s2836 = smul.addr %s2835, 8
      %s2837 = scalar_lea.vmem %s5, %s2836
      // Predicated region
      $region41: #{decoder_forward.1} parent=39 // pred_check
        %p2838 = pneg %p167
      $region42: #{decoder_forward.1} parent=39 // pred_check_branch
        %2840 = sbr.rel (%p2838) target = $region44
      $region43: #{decoder_forward.1} parent=39 // pred_region
        _
      $region44: #{decoder_forward.1} parent=39 // pred_fallthru
        _
    $region40: #{decoder_forward.1} parent=5 // pred_fallthru
      _
    %p2841 = scmp.le.s32.totalorder 2, %s11
    // Predicated region
    $region45: #{decoder_forward.1} parent=5 // pred_check
      %p2842 = pneg %p2841
    $region46: #{decoder_forward.1} parent=5 // pred_check_branch
      %2844 = sbr.rel (%p2842) target = $region48
    $region47: #{decoder_forward.1} parent=5 // pred_region
      %s2845 = ssub.s32 %s11, 2
      // Predicated region
      $region49: #{decoder_forward.1} parent=47 // pred_check
        %p2846 = pneg %p173
      $region50: #{decoder_forward.1} parent=47 // pred_check_branch
        %2848 = sbr.rel (%p2846) target = $region52
      $region51: #{decoder_forward.1} parent=47 // pred_region
        %p2849 = scmp.lt.s32.totalorder %s22, 1
        %s2850 = scalar_select %p2849, %s22, 1
        %p2851 = scmp.lt.s32.totalorder %s23, 0
        %s2852 = scalar_select %p2851, %s23, 0
        %s2853 = smul.addr %s2852, 10
        %s2854 = smul.addr %s2850, 10
        %s2855 = sadd.s32 %s2853, %s2854
        %s2856 = smul.addr %s2855, 8
        %s2857 = scalar_lea.vmem %s5, %s2856
      $region52: #{decoder_forward.1} parent=47 // pred_fallthru
        _
    $region48: #{decoder_forward.1} parent=5 // pred_fallthru
      _
  $region6: #{decoder_forward.1} parent=0 // loop_footer
    %s15 = sadd.s32 1, %s11
  $region7: #{decoder_forward.1} parent=0 // loop_footer_branch
    %10 = sbr.rel target = $region3
  $region8: #{decoder_forward.1} parent=0 // loop_exit
    _

</llo_original>
